<compile_context>
chip_gen: v5e
topology: v5e:2x2
jax: 0.10.0
libtpu: 0.0.40
codegen_flags: <defaults>
</compile_context>

<pallas_src>
import functools

import jax
import jax.numpy as jnp
from jax.experimental import pallas as pl
from jax.experimental.pallas import tpu as pltpu


# ----------------------------- Pallas kernel -------------------------------

def _mlp_kernel(x_ref, w1_ref, b1_ref, w2_ref, b2_ref, w3_ref, b3_ref,
                w4_ref, b4_ref, o_ref):
    # fc1 + folded bn1 + relu      (dropout1: identity, eval mode)
    h = jnp.dot(x_ref[...], w1_ref[...], preferred_element_type=jnp.float32)
    h = jnp.maximum(h + b1_ref[...], 0.0)
    # fc2 + folded bn2 + relu      (dropout2: identity, eval mode)
    h = jnp.dot(h.astype(jnp.bfloat16), w2_ref[...],
                preferred_element_type=jnp.float32)
    h = jnp.maximum(h + b2_ref[...], 0.0)
    # fc3 + folded bn3 + relu      (dropout3: identity, eval mode)
    h = jnp.dot(h.astype(jnp.bfloat16), w3_ref[...],
                preferred_element_type=jnp.float32)
    h = jnp.maximum(h + b3_ref[...], 0.0)
    # fc4 logits (lane-dense padded N)
    out = jnp.dot(h.astype(jnp.bfloat16), w4_ref[...],
                  preferred_element_type=jnp.float32)
    o_ref[...] = (out + b4_ref[...]).astype(o_ref.dtype)


# ------------------------------- JAX glue -----------------------------------

def _round_up(x, m):
    return (x + m - 1) // m * m


def fold_bn_into_linear(w_in_out, b, gamma, beta, mean, var, eps=1e-5):
    """Fold eval-mode BatchNorm1d following a Linear into the Linear itself.
    w_in_out: (in, out).  Returns (w_folded, b_folded)."""
    s = gamma / jnp.sqrt(var + eps)               # (out,)
    return w_in_out * s[None, :], beta + (b - mean) * s


def prepare_params(params, num_classes):
    """One-time prep (call ONCE, outside the per-step jitted forward):
    fold BN into the Linears, pad the logits dim to a lane-dense multiple of
    128, cast matmul operands to bf16 and biases to f32 row vectors."""
    H = params["fc1_w"].shape[1]
    w1, b1 = fold_bn_into_linear(params["fc1_w"], params["fc1_b"],
                                 params["bn1_g"], params["bn1_b"],
                                 params["bn1_m"], params["bn1_v"])
    w2, b2 = fold_bn_into_linear(params["fc2_w"], params["fc2_b"],
                                 params["bn2_g"], params["bn2_b"],
                                 params["bn2_m"], params["bn2_v"])
    w3, b3 = fold_bn_into_linear(params["fc3_w"], params["fc3_b"],
                                 params["bn3_g"], params["bn3_b"],
                                 params["bn3_m"], params["bn3_v"])
    n_pad = _round_up(max(num_classes, 1), 128)
    w4p = jnp.zeros((H, n_pad), jnp.float32).at[:, :num_classes].set(params["fc4_w"])
    b4p = jnp.zeros((n_pad,), jnp.float32).at[:num_classes].set(params["fc4_b"])

    return {
        "w1": w1.astype(jnp.bfloat16), "b1": b1.reshape(1, H).astype(jnp.float32),
        "w2": w2.astype(jnp.bfloat16), "b2": b2.reshape(1, H).astype(jnp.float32),
        "w3": w3.astype(jnp.bfloat16), "b3": b3.reshape(1, H).astype(jnp.float32),
        "w4": w4p.astype(jnp.bfloat16), "b4": b4p.reshape(1, n_pad).astype(jnp.float32),
    }


def _choose_row_tile(B):
    """Row-tile size and padded row count.
    - big tiles (<=2048) amortize the ~0.35us per-grid-step pipeline overhead
    - keep >=2 grid steps when the batch allows it so the "parallel" axis can
      shard across both TensorCores on v7x
    - pick the candidate minimizing pad-row waste (avoids e.g. B=520 -> 1024)
    """
    b8 = _round_up(max(B, 1), 8)                 # sublane alignment
    if b8 <= 1024:
        return b8, b8                            # single full-dim tile
    best_key, best = None, None
    for tm in (2048, 1024, 512):
        m_pad = _round_up(b8, tm)
        if m_pad // tm < 2:                      # need >=2 steps for dual-TC
            continue
        key = (m_pad - b8, -tm)                  # min waste, then bigger tile
        if best_key is None or key < best_key:
            best_key, best = key, (tm, m_pad)
    return best


def mlp_forward(x, prep, num_classes):
    B = x.shape[0]
    x2 = x.reshape(B, -1)                        # x.view(x.size(0), -1)
    D = x2.shape[1]
    H = prep["w1"].shape[1]
    n_pad = prep["w4"].shape[1]

    tm, m_pad = _choose_row_tile(B)
    # Single fused pass over x: bf16 cast + row padding (no f32 materialization).
    xp = jnp.pad(x2.astype(jnp.bfloat16), ((0, m_pad - B), (0, 0)))

    def _resident(shape):
        # Constant index_map -> block never changes; single buffer is enough.
        return pl.BlockSpec(shape, lambda i: (0, 0), pipeline_mode=pl.Buffered(1))

    out = pl.pallas_call(
        _mlp_kernel,
        out_shape=jax.ShapeDtypeStruct((m_pad, n_pad), jnp.float32),
        grid_spec=pltpu.PrefetchScalarGridSpec(
            num_scalar_prefetch=0,
            grid=(m_pad // tm,),
            in_specs=[
                pl.BlockSpec((tm, D), lambda i: (i, 0)),   # x row tile (bf16)
                _resident((D, H)),                         # w1 (bn1 folded)
                _resident((1, H)),                         # b1
                _resident((H, H)),                         # w2 (bn2 folded)
                _resident((1, H)),                         # b2
                _resident((H, H)),                         # w3 (bn3 folded)
                _resident((1, H)),                         # b3
                _resident((H, n_pad)),                     # w4 (lane padded)
                _resident((1, n_pad)),                     # b4 (lane padded)
            ],
            out_specs=pl.BlockSpec((tm, n_pad), lambda i: (i, 0)),
        ),
        compiler_params=pltpu.CompilerParams(
            dimension_semantics=("parallel",),
            vmem_limit_bytes=48 * 1024 * 1024),
    )(xp, prep["w1"], prep["b1"], prep["w2"], prep["b2"],
      prep["w3"], prep["b3"], prep["w4"], prep["b4"])

    # Pad rows are don't-care garbage of row-wise ops; slice them off here.
    return out[:B, :num_classes]


def init_params(key, input_size, hidden_size, num_classes):
    """PyTorch-default init: Linear U(-1/sqrt(fan_in), 1/sqrt(fan_in));
    BatchNorm1d gamma=1, beta=0, running_mean=0, running_var=1.
    Linear weights stored as (in, out) (transposed torch layout)."""
    ks = jax.random.split(key, 8)

    def u(k, shape, fan_in):
        bound = 1.0 / jnp.sqrt(fan_in)
        return jax.random.uniform(k, shape, jnp.float32, -bound, bound)

    p = {}
    p["fc1_w"] = u(ks[0], (input_size, hidden_size), input_size)
    p["fc1_b"] = u(ks[1], (hidden_size,), input_size)
    p["fc2_w"] = u(ks[2], (hidden_size, hidden_size), hidden_size)
    p["fc2_b"] = u(ks[3], (hidden_size,), hidden_size)
    p["fc3_w"] = u(ks[4], (hidden_size, hidden_size), hidden_size)
    p["fc3_b"] = u(ks[5], (hidden_size,), hidden_size)
    p["fc4_w"] = u(ks[6], (hidden_size, num_classes), hidden_size)
    p["fc4_b"] = u(ks[7], (num_classes,), hidden_size)
    for i in (1, 2, 3):
        p[f"bn{i}_g"] = jnp.ones((hidden_size,), jnp.float32)
        p[f"bn{i}_b"] = jnp.zeros((hidden_size,), jnp.float32)
        p[f"bn{i}_m"] = jnp.zeros((hidden_size,), jnp.float32)
        p[f"bn{i}_v"] = jnp.ones((hidden_size,), jnp.float32)
    return p


def reference_forward(x, params, num_classes):
    """Plain-JAX reference with the same bf16-operand / f32-accumulate policy."""
    B = x.shape[0]
    h = x.reshape(B, -1).astype(jnp.float32)

    def block(h, w, b, g, bt, m, v):
        wf, bf = fold_bn_into_linear(w, b, g, bt, m, v)
        y = jnp.dot(h.astype(jnp.bfloat16), wf.astype(jnp.bfloat16),
                    preferred_element_type=jnp.float32) + bf
        return jnp.maximum(y, 0.0)

    h = block(h, params["fc1_w"], params["fc1_b"], params["bn1_g"],
              params["bn1_b"], params["bn1_m"], params["bn1_v"])
    h = block(h, params["fc2_w"], params["fc2_b"], params["bn2_g"],
              params["bn2_b"], params["bn2_m"], params["bn2_v"])
    h = block(h, params["fc3_w"], params["fc3_b"], params["bn3_g"],
              params["bn3_b"], params["bn3_m"], params["bn3_v"])
    logits = jnp.dot(h.astype(jnp.bfloat16),
                     params["fc4_w"].astype(jnp.bfloat16),
                     preferred_element_type=jnp.float32) + params["fc4_b"]
    return logits[:, :num_classes]


if __name__ == "__main__":
    # Input consistent with the module: anything flattened to input_size.
    BATCH = 2
    IN_SHAPE = (BATCH, 4, 16, 16)          # flatten -> input_size = 1024
    INPUT_SIZE = 4 * 16 * 16
    HIDDEN = 256
    NUM_CLASSES = 10

    key = jax.random.PRNGKey(0)
    k_x, k_p = jax.random.split(key)
    x = jax.random.normal(k_x, IN_SHAPE, jnp.float32)
    params = init_params(k_p, INPUT_SIZE, HIDDEN, NUM_CLASSES)

    # One-time parameter prep (BN fold, padding, bf16 cast) outside the jit.
    prep = prepare_params(params, NUM_CLASSES)
    for v in prep.values():
        v.block_until_ready()

    fwd = jax.jit(functools.partial(mlp_forward, num_classes=NUM_CLASSES))
    logits = fwd(x, prep)
    jax.block_until_ready(logits)
    assert logits.shape == (BATCH, NUM_CLASSES)

    ref = reference_forward(x, params, NUM_CLASSES)
    assert jnp.allclose(logits, ref, rtol=2e-2, atol=2e-2), (
        float(jnp.max(jnp.abs(logits - ref))))
    print("KERNEL_OK")
</pallas_src>

<mosaic_0001>
module attributes {stable_mosaic.version = 11 : i64} {
  func.func @_mlp_kernel(%arg0: i32, %arg1: memref<8x1024xbf16, #tpu.memory_space<vmem>>, %arg2: memref<1024x256xbf16, #tpu.memory_space<vmem>>, %arg3: memref<1x256xf32, #tpu.memory_space<vmem>>, %arg4: memref<256x256xbf16, #tpu.memory_space<vmem>>, %arg5: memref<1x256xf32, #tpu.memory_space<vmem>>, %arg6: memref<256x256xbf16, #tpu.memory_space<vmem>>, %arg7: memref<1x256xf32, #tpu.memory_space<vmem>>, %arg8: memref<256x128xbf16, #tpu.memory_space<vmem>>, %arg9: memref<1x128xf32, #tpu.memory_space<vmem>>, %arg10: memref<8x128xf32, #tpu.memory_space<vmem>>) attributes {dimension_semantics = [#tpu.dimension_semantics<parallel>], iteration_bounds = array<i64: 1>, scalar_prefetch = 0 : i64, scratch_operands = 0 : i64, tpu.core_type = #tpu.core_type<tc>, window_params = [{transform_indices = @transform_0, window_bounds = array<i64: 8, 1024>}, {pipeline_mode = #tpu.pipeline_mode<synchronous>, transform_indices = @transform_1, window_bounds = array<i64: 1024, 256>}, {pipeline_mode = #tpu.pipeline_mode<synchronous>, transform_indices = @transform_2, window_bounds = array<i64: 1, 256>}, {pipeline_mode = #tpu.pipeline_mode<synchronous>, transform_indices = @transform_3, window_bounds = array<i64: 256, 256>}, {pipeline_mode = #tpu.pipeline_mode<synchronous>, transform_indices = @transform_4, window_bounds = array<i64: 1, 256>}, {pipeline_mode = #tpu.pipeline_mode<synchronous>, transform_indices = @transform_5, window_bounds = array<i64: 256, 256>}, {pipeline_mode = #tpu.pipeline_mode<synchronous>, transform_indices = @transform_6, window_bounds = array<i64: 1, 256>}, {pipeline_mode = #tpu.pipeline_mode<synchronous>, transform_indices = @transform_7, window_bounds = array<i64: 256, 128>}, {pipeline_mode = #tpu.pipeline_mode<synchronous>, transform_indices = @transform_8, window_bounds = array<i64: 1, 128>}, {transform_indices = @transform_9, window_bounds = array<i64: 8, 128>}]} {
    %c0 = arith.constant 0 : index
    %c0_0 = arith.constant 0 : index
    %0 = vector.load %arg1[%c0, %c0_0] : memref<8x1024xbf16, #tpu.memory_space<vmem>>, vector<8x1024xbf16>
    %c0_1 = arith.constant 0 : index
    %c0_2 = arith.constant 0 : index
    %1 = vector.load %arg2[%c0_1, %c0_2] : memref<1024x256xbf16, #tpu.memory_space<vmem>>, vector<1024x256xbf16>
    %cst = arith.constant dense<0.000000e+00> : vector<8x256xf32>
    %2 = tpu.matmul %0, %1, %cst {dimension_numbers = #tpu.dot_dimension_numbers<[1], [0], [0], [1], [0, 0, 1, 1], [], []>} : vector<8x1024xbf16>, vector<1024x256xbf16>, vector<8x256xf32> -> vector<8x256xf32>
    %c0_3 = arith.constant 0 : index
    %c0_4 = arith.constant 0 : index
    %3 = vector.load %arg3[%c0_3, %c0_4] : memref<1x256xf32, #tpu.memory_space<vmem>>, vector<1x256xf32>
    %4 = vector.broadcast %3 : vector<1x256xf32> to vector<8x256xf32>
    %5 = arith.addf %2, %4 : vector<8x256xf32>
    %cst_5 = arith.constant 0.000000e+00 : f32
    %6 = vector.broadcast %cst_5 : f32 to vector<8x256xf32>
    %7 = arith.maximumf %5, %6 : vector<8x256xf32>
    %8 = arith.truncf %7 : vector<8x256xf32> to vector<8x256xbf16>
    %c0_6 = arith.constant 0 : index
    %c0_7 = arith.constant 0 : index
    %9 = vector.load %arg4[%c0_6, %c0_7] : memref<256x256xbf16, #tpu.memory_space<vmem>>, vector<256x256xbf16>
    %cst_8 = arith.constant dense<0.000000e+00> : vector<8x256xf32>
    %10 = tpu.matmul %8, %9, %cst_8 {dimension_numbers = #tpu.dot_dimension_numbers<[1], [0], [0], [1], [0, 0, 1, 1], [], []>} : vector<8x256xbf16>, vector<256x256xbf16>, vector<8x256xf32> -> vector<8x256xf32>
    %c0_9 = arith.constant 0 : index
    %c0_10 = arith.constant 0 : index
    %11 = vector.load %arg5[%c0_9, %c0_10] : memref<1x256xf32, #tpu.memory_space<vmem>>, vector<1x256xf32>
    %12 = vector.broadcast %11 : vector<1x256xf32> to vector<8x256xf32>
    %13 = arith.addf %10, %12 : vector<8x256xf32>
    %cst_11 = arith.constant 0.000000e+00 : f32
    %14 = vector.broadcast %cst_11 : f32 to vector<8x256xf32>
    %15 = arith.maximumf %13, %14 : vector<8x256xf32>
    %16 = arith.truncf %15 : vector<8x256xf32> to vector<8x256xbf16>
    %c0_12 = arith.constant 0 : index
    %c0_13 = arith.constant 0 : index
    %17 = vector.load %arg6[%c0_12, %c0_13] : memref<256x256xbf16, #tpu.memory_space<vmem>>, vector<256x256xbf16>
    %cst_14 = arith.constant dense<0.000000e+00> : vector<8x256xf32>
    %18 = tpu.matmul %16, %17, %cst_14 {dimension_numbers = #tpu.dot_dimension_numbers<[1], [0], [0], [1], [0, 0, 1, 1], [], []>} : vector<8x256xbf16>, vector<256x256xbf16>, vector<8x256xf32> -> vector<8x256xf32>
    %c0_15 = arith.constant 0 : index
    %c0_16 = arith.constant 0 : index
    %19 = vector.load %arg7[%c0_15, %c0_16] : memref<1x256xf32, #tpu.memory_space<vmem>>, vector<1x256xf32>
    %20 = vector.broadcast %19 : vector<1x256xf32> to vector<8x256xf32>
    %21 = arith.addf %18, %20 : vector<8x256xf32>
    %cst_17 = arith.constant 0.000000e+00 : f32
    %22 = vector.broadcast %cst_17 : f32 to vector<8x256xf32>
    %23 = arith.maximumf %21, %22 : vector<8x256xf32>
    %24 = arith.truncf %23 : vector<8x256xf32> to vector<8x256xbf16>
    %c0_18 = arith.constant 0 : index
    %c0_19 = arith.constant 0 : index
    %25 = vector.load %arg8[%c0_18, %c0_19] : memref<256x128xbf16, #tpu.memory_space<vmem>>, vector<256x128xbf16>
    %cst_20 = arith.constant dense<0.000000e+00> : vector<8x128xf32>
    %26 = tpu.matmul %24, %25, %cst_20 {dimension_numbers = #tpu.dot_dimension_numbers<[1], [0], [0], [1], [0, 0, 1, 1], [], []>} : vector<8x256xbf16>, vector<256x128xbf16>, vector<8x128xf32> -> vector<8x128xf32>
    %c0_21 = arith.constant 0 : index
    %c0_22 = arith.constant 0 : index
    %27 = vector.load %arg9[%c0_21, %c0_22] : memref<1x128xf32, #tpu.memory_space<vmem>>, vector<1x128xf32>
    %28 = vector.broadcast %27 : vector<1x128xf32> to vector<8x128xf32>
    %29 = arith.addf %26, %28 : vector<8x128xf32>
    %c0_23 = arith.constant 0 : index
    %c0_24 = arith.constant 0 : index
    %30 = vector.load %arg10[%c0_23, %c0_24] : memref<8x128xf32, #tpu.memory_space<vmem>>, vector<8x128xf32>
    tpu.vector_store %arg10[%c0_23, %c0_24], %29 {strides = array<i32>} : memref<8x128xf32, #tpu.memory_space<vmem>>, vector<8x128xf32>,
    return
  }
  func.func @transform_0(%arg0: i32) -> (i32, i32) {
    %c0_i32 = arith.constant 0 : i32
    %c0_i32_0 = arith.constant 0 : i32
    return %arg0, %c0_i32 : i32, i32
  }
  func.func @transform_1(%arg0: i32) -> (i32, i32) {
    %c0_i32 = arith.constant 0 : i32
    %c0_i32_0 = arith.constant 0 : i32
    %c0_i32_1 = arith.constant 0 : i32
    return %c0_i32, %c0_i32_0 : i32, i32
  }
  func.func @transform_2(%arg0: i32) -> (i32, i32) {
    %c0_i32 = arith.constant 0 : i32
    %c0_i32_0 = arith.constant 0 : i32
    %c0_i32_1 = arith.constant 0 : i32
    return %c0_i32, %c0_i32_0 : i32, i32
  }
  func.func @transform_3(%arg0: i32) -> (i32, i32) {
    %c0_i32 = arith.constant 0 : i32
    %c0_i32_0 = arith.constant 0 : i32
    %c0_i32_1 = arith.constant 0 : i32
    return %c0_i32, %c0_i32_0 : i32, i32
  }
  func.func @transform_4(%arg0: i32) -> (i32, i32) {
    %c0_i32 = arith.constant 0 : i32
    %c0_i32_0 = arith.constant 0 : i32
    %c0_i32_1 = arith.constant 0 : i32
    return %c0_i32, %c0_i32_0 : i32, i32
  }
  func.func @transform_5(%arg0: i32) -> (i32, i32) {
    %c0_i32 = arith.constant 0 : i32
    %c0_i32_0 = arith.constant 0 : i32
    %c0_i32_1 = arith.constant 0 : i32
    return %c0_i32, %c0_i32_0 : i32, i32
  }
  func.func @transform_6(%arg0: i32) -> (i32, i32) {
    %c0_i32 = arith.constant 0 : i32
    %c0_i32_0 = arith.constant 0 : i32
    %c0_i32_1 = arith.constant 0 : i32
    return %c0_i32, %c0_i32_0 : i32, i32
  }
  func.func @transform_7(%arg0: i32) -> (i32, i32) {
    %c0_i32 = arith.constant 0 : i32
    %c0_i32_0 = arith.constant 0 : i32
    %c0_i32_1 = arith.constant 0 : i32
    return %c0_i32, %c0_i32_0 : i32, i32
  }
  func.func @transform_8(%arg0: i32) -> (i32, i32) {
    %c0_i32 = arith.constant 0 : i32
    %c0_i32_0 = arith.constant 0 : i32
    %c0_i32_1 = arith.constant 0 : i32
    return %c0_i32, %c0_i32_0 : i32, i32
  }
  func.func @transform_9(%arg0: i32) -> (i32, i32) {
    %c0_i32 = arith.constant 0 : i32
    %c0_i32_0 = arith.constant 0 : i32
    return %arg0, %c0_i32 : i32, i32
  }
}

</mosaic_0001>

<llo_original>
// kernel: mlp_forward.1
$region0: #{mlp_forward.1}
  #allocation0 [shape = 'u32[]', space=smem, size = 0x4, offset = 0x4, fixed_abs, tag = 'smem constant byte address 0x4 - core index']
  #allocation1 [shape = 'u32[72,128]{1,0:T(1,128)}', space=vmem, size = 0x9000, scoped, tag = 'internal scratch']
  %s0 = inlined_call_operand.vmem [shape: bf16[8,1024], index: 0, kind: input, shape index: {}]
  %s1 = inlined_call_operand.hbm [shape: bf16[1024,256], index: 1, kind: input, shape index: {}]
  %s2 = inlined_call_operand.vmem [shape: f32[1,256], index: 2, kind: input, shape index: {}]
  %s3 = inlined_call_operand.vmem [shape: bf16[256,256], index: 3, kind: input, shape index: {}]
  %s4 = inlined_call_operand.vmem [shape: f32[1,256], index: 4, kind: input, shape index: {}]
  %s5 = inlined_call_operand.hbm [shape: bf16[256,256], index: 5, kind: input, shape index: {}]
  %s6 = inlined_call_operand.vmem [shape: f32[1,256], index: 6, kind: input, shape index: {}]
  %s7 = inlined_call_operand.hbm [shape: bf16[256,128], index: 7, kind: input, shape index: {}]
  %s8 = inlined_call_operand.vmem [shape: f32[1,128], index: 8, kind: input, shape index: {}]
  %s9 = inlined_call_operand.vmem [shape: f32[8,128], index: 9, kind: output, shape index: {}]
  %s10 = sld [smem:[#allocation0]]
  $region58: #{mlp_forward.1} parent=0
    _
  %s12 = ssub.s32 1, %s10
  %s13 = scalar_select 0, %s12, %s10
  $region1: #{mlp_forward.1} parent=0
    #allocation2 [shape = 'u8[524288]{0}', space=vmem, size = 0x80000, scoped, tag = 'input window, operand 1, single buffered']
    #allocation3 [shape = 's32[1]{0}', space=sflag, size = 0x4, scoped, tag = 'scoped memory for mlp_forward.1']
    #allocation4 [shape = 'u8[131072]{0}', space=vmem, size = 0x20000, scoped, tag = 'input window, operand 5, single buffered']
    #allocation5 [shape = 's32[1]{0}', space=sflag, size = 0x4, scoped, tag = 'scoped memory for mlp_forward.1']
    #allocation6 [shape = 'u8[65536]{0}', space=vmem, size = 0x10000, scoped, tag = 'input window, operand 7, single buffered']
    %14 = vsyncpa [#allocation3], 0
    %15 = vsyncpa [#allocation5], 0
    // Predicated region
    $region2: #{mlp_forward.1} parent=1 // pred_check
      _
    $region3: #{mlp_forward.1} parent=1 // pred_check_branch
      %17 = sbr.rel (0) target = $region5
    $region4: #{mlp_forward.1} parent=1 // pred_region
      _
    $region5: #{mlp_forward.1} parent=1 // pred_fallthru
      _
    // Predicated region
    $region6: #{mlp_forward.1} parent=1 // pred_check
      _
    $region7: #{mlp_forward.1} parent=1 // pred_check_branch
      %19 = sbr.rel (0) target = $region9
    $region8: #{mlp_forward.1} parent=1 // pred_region
      %21 = vsyncadd [#allocation3], 0
      %s22 = sshll.u32 %s1, 4
      %s23 = int_to_ptr.hbm [resolvable:$true] %s22
      %s24 = sshll.u32 [#allocation2], 4
      %s25 = int_to_ptr.vmem [resolvable:$true] %s24
      %30 = dma.hbm_to_vmem [thread:$0]  %s23, 16384, %s25, [#allocation3], 128, 128, 8
    $region9: #{mlp_forward.1} parent=1 // pred_fallthru
      _
    // Predicated region
    $region10: #{mlp_forward.1} parent=1 // pred_check
      _
    $region11: #{mlp_forward.1} parent=1 // pred_check_branch
      %32 = sbr.rel (0) target = $region13
    $region12: #{mlp_forward.1} parent=1 // pred_region
      _
    $region13: #{mlp_forward.1} parent=1 // pred_fallthru
      _
    // Predicated region
    $region14: #{mlp_forward.1} parent=1 // pred_check
      _
    $region15: #{mlp_forward.1} parent=1 // pred_check_branch
      %34 = sbr.rel (0) target = $region17
    $region16: #{mlp_forward.1} parent=1 // pred_region
      _
    $region17: #{mlp_forward.1} parent=1 // pred_fallthru
      _
    // Predicated region
    $region18: #{mlp_forward.1} parent=1 // pred_check
      _
    $region19: #{mlp_forward.1} parent=1 // pred_check_branch
      %36 = sbr.rel (0) target = $region21
    $region20: #{mlp_forward.1} parent=1 // pred_region
      _
    $region21: #{mlp_forward.1} parent=1 // pred_fallthru
      _
    // Predicated region
    $region22: #{mlp_forward.1} parent=1 // pred_check
      _
    $region23: #{mlp_forward.1} parent=1 // pred_check_branch
      %38 = sbr.rel (0) target = $region25
    $region24: #{mlp_forward.1} parent=1 // pred_region
      %40 = vsyncadd [#allocation5], 0
      %s41 = sshll.u32 %s5, 4
      %s42 = int_to_ptr.hbm [resolvable:$true] %s41
      %s43 = sshll.u32 [#allocation4], 4
      %s44 = int_to_ptr.vmem [resolvable:$true] %s43
      %49 = dma.hbm_to_vmem [thread:$0]  %s42, 4096, %s44, [#allocation5], 128, 128, 8
    $region25: #{mlp_forward.1} parent=1 // pred_fallthru
      _
    // Predicated region
    $region26: #{mlp_forward.1} parent=1 // pred_check
      _
    $region27: #{mlp_forward.1} parent=1 // pred_check_branch
      %51 = sbr.rel (0) target = $region29
    $region28: #{mlp_forward.1} parent=1 // pred_region
      _
    $region29: #{mlp_forward.1} parent=1 // pred_fallthru
      _
    // Predicated region
    $region30: #{mlp_forward.1} parent=1 // pred_check
      _
    $region31: #{mlp_forward.1} parent=1 // pred_check_branch
      %53 = sbr.rel (0) target = $region33
    $region32: #{mlp_forward.1} parent=1 // pred_region
      %55 = vsyncadd [#allocation5], 0
      %s56 = sshll.u32 %s7, 4
      %s57 = int_to_ptr.hbm [resolvable:$true] %s56
      %s58 = sshll.u32 [#allocation6], 4
      %s59 = int_to_ptr.vmem [resolvable:$true] %s58
      %64 = dma.hbm_to_vmem [thread:$0]  %s57, 2048, %s59, [#allocation5], 64, 64, 4
    $region33: #{mlp_forward.1} parent=1 // pred_fallthru
      _
    // Predicated region
    $region34: #{mlp_forward.1} parent=1 // pred_check
      _
    $region35: #{mlp_forward.1} parent=1 // pred_check_branch
      %66 = sbr.rel (0) target = $region37
    $region36: #{mlp_forward.1} parent=1 // pred_region
      _
    $region37: #{mlp_forward.1} parent=1 // pred_fallthru
      _
    // Predicated region
    $region38: #{mlp_forward.1} parent=1 // pred_check
      _
    $region39: #{mlp_forward.1} parent=1 // pred_check_branch
      %68 = sbr.rel (0) target = $region41
    $region40: #{mlp_forward.1} parent=1 // pred_region
      %70 = dma.done [#allocation3], 16384
    $region41: #{mlp_forward.1} parent=1 // pred_fallthru
      _
    // Predicated region
    $region42: #{mlp_forward.1} parent=1 // pred_check
      _
    $region43: #{mlp_forward.1} parent=1 // pred_check_branch
      %72 = sbr.rel (0) target = $region45
    $region44: #{mlp_forward.1} parent=1 // pred_region
      %74 = dma.done [#allocation5], 4096
    $region45: #{mlp_forward.1} parent=1 // pred_fallthru
      _
    // Predicated region
    $region46: #{mlp_forward.1} parent=1 // pred_check
      _
    $region47: #{mlp_forward.1} parent=1 // pred_check_branch
      %76 = sbr.rel (0) target = $region49
    $region48: #{mlp_forward.1} parent=1 // pred_region
      %78 = dma.done [#allocation5], 2048
    $region49: #{mlp_forward.1} parent=1 // pred_fallthru
      _
    %v79 = vld [vmem:[%s0] sm:$0xff]
    %v80 = vld [vmem:[%s0 + $0x8] sm:$0xff]
    %v81 = vld [vmem:[%s0 + $0x10] sm:$0xff]
    %v82 = vld [vmem:[%s0 + $0x18] sm:$0xff]
    %v83 = vld [vmem:[#allocation2] sm:$0xff]
    %v84 = vld [vmem:[#allocation2 + $0x8] sm:$0xff]
    %v85 = vld [vmem:[#allocation2 + $0x10] sm:$0xff]
    %v86 = vld [vmem:[#allocation2 + $0x18] sm:$0xff]
    %v87 = vld [vmem:[#allocation2 + $0x20] sm:$0xff]
    %v88 = vld [vmem:[#allocation2 + $0x28] sm:$0xff]
    %v89 = vld [vmem:[#allocation2 + $0x30] sm:$0xff]
    %v90 = vld [vmem:[#allocation2 + $0x38] sm:$0xff]
    %v91 = vld [vmem:[#allocation2 + $0x40] sm:$0xff]
    %v92 = vld [vmem:[#allocation2 + $0x48] sm:$0xff]
    %v93 = vld [vmem:[#allocation2 + $0x50] sm:$0xff]
    %v94 = vld [vmem:[#allocation2 + $0x58] sm:$0xff]
    %v95 = vld [vmem:[#allocation2 + $0x60] sm:$0xff]
    %v96 = vld [vmem:[#allocation2 + $0x68] sm:$0xff]
    %v97 = vld [vmem:[#allocation2 + $0x70] sm:$0xff]
    %v98 = vld [vmem:[#allocation2 + $0x78] sm:$0xff]
    %v99 = vld [vmem:[#allocation2 + $0x80] sm:$0xff]
    %v100 = vld [vmem:[#allocation2 + $0x88] sm:$0xff]
    %v101 = vld [vmem:[#allocation2 + $0x90] sm:$0xff]
    %v102 = vld [vmem:[#allocation2 + $0x98] sm:$0xff]
    %v103 = vld [vmem:[#allocation2 + $0xa0] sm:$0xff]
    %v104 = vld [vmem:[#allocation2 + $0xa8] sm:$0xff]
    %v105 = vld [vmem:[#allocation2 + $0xb0] sm:$0xff]
    %v106 = vld [vmem:[#allocation2 + $0xb8] sm:$0xff]
    %v107 = vld [vmem:[#allocation2 + $0xc0] sm:$0xff]
    %v108 = vld [vmem:[#allocation2 + $0xc8] sm:$0xff]
    %v109 = vld [vmem:[#allocation2 + $0xd0] sm:$0xff]
    %v110 = vld [vmem:[#allocation2 + $0xd8] sm:$0xff]
    %v111 = vld [vmem:[#allocation2 + $0xe0] sm:$0xff]
    %v112 = vld [vmem:[#allocation2 + $0xe8] sm:$0xff]
    %v113 = vld [vmem:[#allocation2 + $0xf0] sm:$0xff]
    %v114 = vld [vmem:[#allocation2 + $0xf8] sm:$0xff]
    %v115 = vld [vmem:[#allocation2 + $0x100] sm:$0xff]
    %v116 = vld [vmem:[#allocation2 + $0x108] sm:$0xff]
    %v117 = vld [vmem:[#allocation2 + $0x110] sm:$0xff]
    %v118 = vld [vmem:[#allocation2 + $0x118] sm:$0xff]
    %v119 = vld [vmem:[#allocation2 + $0x120] sm:$0xff]
    %v120 = vld [vmem:[#allocation2 + $0x128] sm:$0xff]
    %v121 = vld [vmem:[#allocation2 + $0x130] sm:$0xff]
    %v122 = vld [vmem:[#allocation2 + $0x138] sm:$0xff]
    %v123 = vld [vmem:[#allocation2 + $0x140] sm:$0xff]
    %v124 = vld [vmem:[#allocation2 + $0x148] sm:$0xff]
    %v125 = vld [vmem:[#allocation2 + $0x150] sm:$0xff]
    %v126 = vld [vmem:[#allocation2 + $0x158] sm:$0xff]
    %v127 = vld [vmem:[#allocation2 + $0x160] sm:$0xff]
    %v128 = vld [vmem:[#allocation2 + $0x168] sm:$0xff]
    %v129 = vld [vmem:[#allocation2 + $0x170] sm:$0xff]
    %v130 = vld [vmem:[#allocation2 + $0x178] sm:$0xff]
    %v131 = vld [vmem:[#allocation2 + $0x180] sm:$0xff]
    %v132 = vld [vmem:[#allocation2 + $0x188] sm:$0xff]
    %v133 = vld [vmem:[#allocation2 + $0x190] sm:$0xff]
    %v134 = vld [vmem:[#allocation2 + $0x198] sm:$0xff]
    %v135 = vld [vmem:[#allocation2 + $0x1a0] sm:$0xff]
    %v136 = vld [vmem:[#allocation2 + $0x1a8] sm:$0xff]
    %v137 = vld [vmem:[#allocation2 + $0x1b0] sm:$0xff]
    %v138 = vld [vmem:[#allocation2 + $0x1b8] sm:$0xff]
    %v139 = vld [vmem:[#allocation2 + $0x1c0] sm:$0xff]
    %v140 = vld [vmem:[#allocation2 + $0x1c8] sm:$0xff]
    %v141 = vld [vmem:[#allocation2 + $0x1d0] sm:$0xff]
    %v142 = vld [vmem:[#allocation2 + $0x1d8] sm:$0xff]
    %v143 = vld [vmem:[#allocation2 + $0x1e0] sm:$0xff]
    %v144 = vld [vmem:[#allocation2 + $0x1e8] sm:$0xff]
    %v145 = vld [vmem:[#allocation2 + $0x1f0] sm:$0xff]
    %v146 = vld [vmem:[#allocation2 + $0x1f8] sm:$0xff]
    %v147 = vld [vmem:[#allocation2 + $0x200] sm:$0xff]
    %v148 = vld [vmem:[#allocation2 + $0x208] sm:$0xff]
    %v149 = vld [vmem:[#allocation2 + $0x210] sm:$0xff]
    %v150 = vld [vmem:[#allocation2 + $0x218] sm:$0xff]
    %v151 = vld [vmem:[#allocation2 + $0x220] sm:$0xff]
    %v152 = vld [vmem:[#allocation2 + $0x228] sm:$0xff]
    %v153 = vld [vmem:[#allocation2 + $0x230] sm:$0xff]
    %v154 = vld [vmem:[#allocation2 + $0x238] sm:$0xff]
    %v155 = vld [vmem:[#allocation2 + $0x240] sm:$0xff]
    %v156 = vld [vmem:[#allocation2 + $0x248] sm:$0xff]
    %v157 = vld [vmem:[#allocation2 + $0x250] sm:$0xff]
    %v158 = vld [vmem:[#allocation2 + $0x258] sm:$0xff]
    %v159 = vld [vmem:[#allocation2 + $0x260] sm:$0xff]
    %v160 = vld [vmem:[#allocation2 + $0x268] sm:$0xff]
    %v161 = vld [vmem:[#allocation2 + $0x270] sm:$0xff]
    %v162 = vld [vmem:[#allocation2 + $0x278] sm:$0xff]
    %v163 = vld [vmem:[#allocation2 + $0x280] sm:$0xff]
    %v164 = vld [vmem:[#allocation2 + $0x288] sm:$0xff]
    %v165 = vld [vmem:[#allocation2 + $0x290] sm:$0xff]
    %v166 = vld [vmem:[#allocation2 + $0x298] sm:$0xff]
    %v167 = vld [vmem:[#allocation2 + $0x2a0] sm:$0xff]
    %v168 = vld [vmem:[#allocation2 + $0x2a8] sm:$0xff]
    %v169 = vld [vmem:[#allocation2 + $0x2b0] sm:$0xff]
    %v170 = vld [vmem:[#allocation2 + $0x2b8] sm:$0xff]
    %v171 = vld [vmem:[#allocation2 + $0x2c0] sm:$0xff]
    %v172 = vld [vmem:[#allocation2 + $0x2c8] sm:$0xff]
    %v173 = vld [vmem:[#allocation2 + $0x2d0] sm:$0xff]
    %v174 = vld [vmem:[#allocation2 + $0x2d8] sm:$0xff]
    %v175 = vld [vmem:[#allocation2 + $0x2e0] sm:$0xff]
    %v176 = vld [vmem:[#allocation2 + $0x2e8] sm:$0xff]
    %v177 = vld [vmem:[#allocation2 + $0x2f0] sm:$0xff]
    %v178 = vld [vmem:[#allocation2 + $0x2f8] sm:$0xff]
    %v179 = vld [vmem:[#allocation2 + $0x300] sm:$0xff]
    %v180 = vld [vmem:[#allocation2 + $0x308] sm:$0xff]
    %v181 = vld [vmem:[#allocation2 + $0x310] sm:$0xff]
    %v182 = vld [vmem:[#allocation2 + $0x318] sm:$0xff]
    %v183 = vld [vmem:[#allocation2 + $0x320] sm:$0xff]
    %v184 = vld [vmem:[#allocation2 + $0x328] sm:$0xff]
    %v185 = vld [vmem:[#allocation2 + $0x330] sm:$0xff]
    %v186 = vld [vmem:[#allocation2 + $0x338] sm:$0xff]
    %v187 = vld [vmem:[#allocation2 + $0x340] sm:$0xff]
    %v188 = vld [vmem:[#allocation2 + $0x348] sm:$0xff]
    %v189 = vld [vmem:[#allocation2 + $0x350] sm:$0xff]
    %v190 = vld [vmem:[#allocation2 + $0x358] sm:$0xff]
    %v191 = vld [vmem:[#allocation2 + $0x360] sm:$0xff]
    %v192 = vld [vmem:[#allocation2 + $0x368] sm:$0xff]
    %v193 = vld [vmem:[#allocation2 + $0x370] sm:$0xff]
    %v194 = vld [vmem:[#allocation2 + $0x378] sm:$0xff]
    %v195 = vld [vmem:[#allocation2 + $0x380] sm:$0xff]
    %v196 = vld [vmem:[#allocation2 + $0x388] sm:$0xff]
    %v197 = vld [vmem:[#allocation2 + $0x390] sm:$0xff]
    %v198 = vld [vmem:[#allocation2 + $0x398] sm:$0xff]
    %v199 = vld [vmem:[#allocation2 + $0x3a0] sm:$0xff]
    %v200 = vld [vmem:[#allocation2 + $0x3a8] sm:$0xff]
    %v201 = vld [vmem:[#allocation2 + $0x3b0] sm:$0xff]
    %v202 = vld [vmem:[#allocation2 + $0x3b8] sm:$0xff]
    %v203 = vld [vmem:[#allocation2 + $0x3c0] sm:$0xff]
    %v204 = vld [vmem:[#allocation2 + $0x3c8] sm:$0xff]
    %v205 = vld [vmem:[#allocation2 + $0x3d0] sm:$0xff]
    %v206 = vld [vmem:[#allocation2 + $0x3d8] sm:$0xff]
    %v207 = vld [vmem:[#allocation2 + $0x3e0] sm:$0xff]
    %v208 = vld [vmem:[#allocation2 + $0x3e8] sm:$0xff]
    %v209 = vld [vmem:[#allocation2 + $0x3f0] sm:$0xff]
    %v210 = vld [vmem:[#allocation2 + $0x3f8] sm:$0xff]
    %v211 = vld [vmem:[%s2] sm:$0x3]
    %v213 = vperm.slane %v211, 0
    %v214 = vperm.slane %v211, 1
    %v221 = vunpack.c.l.b16 %v79
    %v222 = vunpack.c.h.b16 %v79
    %v223 = vunpack.c.l.b16 %v80
    %v224 = vunpack.c.h.b16 %v80
    %v225 = vunpack.c.l.b16 %v81
    %v226 = vunpack.c.h.b16 %v81
    %v227 = vunpack.c.l.b16 %v82
    %v228 = vunpack.c.h.b16 %v82
    %v229 = vpack.c.b16 %v221, %v221
    %v230 = vpack.c.b16 %v222, %v222
    %v231 = vpack.c.b16 %v223, %v223
    %v232 = vpack.c.b16 %v224, %v224
    %v233 = vpack.c.b16 %v225, %v225
    %v234 = vpack.c.b16 %v226, %v226
    %v235 = vpack.c.b16 %v227, %v227
    %v236 = vpack.c.b16 %v228, %v228
    %v373 = vunpack.c.l.b16 %v83
    %v374 = vunpack.c.h.b16 %v83
    %v375 = vunpack.c.l.b16 %v84
    %v376 = vunpack.c.h.b16 %v84
    %v377 = vunpack.c.l.b16 %v85
    %v378 = vunpack.c.h.b16 %v85
    %v379 = vunpack.c.l.b16 %v86
    %v380 = vunpack.c.h.b16 %v86
    %v381 = vunpack.c.l.b16 %v87
    %v382 = vunpack.c.h.b16 %v87
    %v383 = vunpack.c.l.b16 %v88
    %v384 = vunpack.c.h.b16 %v88
    %v385 = vunpack.c.l.b16 %v89
    %v386 = vunpack.c.h.b16 %v89
    %v387 = vunpack.c.l.b16 %v90
    %v388 = vunpack.c.h.b16 %v90
    %v389 = vunpack.c.l.b16 %v91
    %v390 = vunpack.c.h.b16 %v91
    %v391 = vunpack.c.l.b16 %v92
    %v392 = vunpack.c.h.b16 %v92
    %v393 = vunpack.c.l.b16 %v93
    %v394 = vunpack.c.h.b16 %v93
    %v395 = vunpack.c.l.b16 %v94
    %v396 = vunpack.c.h.b16 %v94
    %v397 = vunpack.c.l.b16 %v95
    %v398 = vunpack.c.h.b16 %v95
    %v399 = vunpack.c.l.b16 %v96
    %v400 = vunpack.c.h.b16 %v96
    %v401 = vunpack.c.l.b16 %v97
    %v402 = vunpack.c.h.b16 %v97
    %v403 = vunpack.c.l.b16 %v98
    %v404 = vunpack.c.h.b16 %v98
    %v405 = vunpack.c.l.b16 %v99
    %v406 = vunpack.c.h.b16 %v99
    %v407 = vunpack.c.l.b16 %v100
    %v408 = vunpack.c.h.b16 %v100
    %v409 = vunpack.c.l.b16 %v101
    %v410 = vunpack.c.h.b16 %v101
    %v411 = vunpack.c.l.b16 %v102
    %v412 = vunpack.c.h.b16 %v102
    %v413 = vunpack.c.l.b16 %v103
    %v414 = vunpack.c.h.b16 %v103
    %v415 = vunpack.c.l.b16 %v104
    %v416 = vunpack.c.h.b16 %v104
    %v417 = vunpack.c.l.b16 %v105
    %v418 = vunpack.c.h.b16 %v105
    %v419 = vunpack.c.l.b16 %v106
    %v420 = vunpack.c.h.b16 %v106
    %v421 = vunpack.c.l.b16 %v107
    %v422 = vunpack.c.h.b16 %v107
    %v423 = vunpack.c.l.b16 %v108
    %v424 = vunpack.c.h.b16 %v108
    %v425 = vunpack.c.l.b16 %v109
    %v426 = vunpack.c.h.b16 %v109
    %v427 = vunpack.c.l.b16 %v110
    %v428 = vunpack.c.h.b16 %v110
    %v429 = vunpack.c.l.b16 %v111
    %v430 = vunpack.c.h.b16 %v111
    %v431 = vunpack.c.l.b16 %v112
    %v432 = vunpack.c.h.b16 %v112
    %v433 = vunpack.c.l.b16 %v113
    %v434 = vunpack.c.h.b16 %v113
    %v435 = vunpack.c.l.b16 %v114
    %v436 = vunpack.c.h.b16 %v114
    %v437 = vunpack.c.l.b16 %v115
    %v438 = vunpack.c.h.b16 %v115
    %v439 = vunpack.c.l.b16 %v116
    %v440 = vunpack.c.h.b16 %v116
    %v441 = vunpack.c.l.b16 %v117
    %v442 = vunpack.c.h.b16 %v117
    %v443 = vunpack.c.l.b16 %v118
    %v444 = vunpack.c.h.b16 %v118
    %v445 = vunpack.c.l.b16 %v119
    %v446 = vunpack.c.h.b16 %v119
    %v447 = vunpack.c.l.b16 %v120
    %v448 = vunpack.c.h.b16 %v120
    %v449 = vunpack.c.l.b16 %v121
    %v450 = vunpack.c.h.b16 %v121
    %v451 = vunpack.c.l.b16 %v122
    %v452 = vunpack.c.h.b16 %v122
    %v453 = vunpack.c.l.b16 %v123
    %v454 = vunpack.c.h.b16 %v123
    %v455 = vunpack.c.l.b16 %v124
    %v456 = vunpack.c.h.b16 %v124
    %v457 = vunpack.c.l.b16 %v125
    %v458 = vunpack.c.h.b16 %v125
    %v459 = vunpack.c.l.b16 %v126
    %v460 = vunpack.c.h.b16 %v126
    %v461 = vunpack.c.l.b16 %v127
    %v462 = vunpack.c.h.b16 %v127
    %v463 = vunpack.c.l.b16 %v128
    %v464 = vunpack.c.h.b16 %v128
    %v465 = vunpack.c.l.b16 %v129
    %v466 = vunpack.c.h.b16 %v129
    %v467 = vunpack.c.l.b16 %v130
    %v468 = vunpack.c.h.b16 %v130
    %v469 = vunpack.c.l.b16 %v131
    %v470 = vunpack.c.h.b16 %v131
    %v471 = vunpack.c.l.b16 %v132
    %v472 = vunpack.c.h.b16 %v132
    %v473 = vunpack.c.l.b16 %v133
    %v474 = vunpack.c.h.b16 %v133
    %v475 = vunpack.c.l.b16 %v134
    %v476 = vunpack.c.h.b16 %v134
    %v477 = vunpack.c.l.b16 %v135
    %v478 = vunpack.c.h.b16 %v135
    %v479 = vunpack.c.l.b16 %v136
    %v480 = vunpack.c.h.b16 %v136
    %v481 = vunpack.c.l.b16 %v137
    %v482 = vunpack.c.h.b16 %v137
    %v483 = vunpack.c.l.b16 %v138
    %v484 = vunpack.c.h.b16 %v138
    %v485 = vunpack.c.l.b16 %v139
    %v486 = vunpack.c.h.b16 %v139
    %v487 = vunpack.c.l.b16 %v140
    %v488 = vunpack.c.h.b16 %v140
    %v489 = vunpack.c.l.b16 %v141
    %v490 = vunpack.c.h.b16 %v141
    %v491 = vunpack.c.l.b16 %v142
    %v492 = vunpack.c.h.b16 %v142
    %v493 = vunpack.c.l.b16 %v143
    %v494 = vunpack.c.h.b16 %v143
    %v495 = vunpack.c.l.b16 %v144
    %v496 = vunpack.c.h.b16 %v144
    %v497 = vunpack.c.l.b16 %v145
    %v498 = vunpack.c.h.b16 %v145
    %v499 = vunpack.c.l.b16 %v146
    %v500 = vunpack.c.h.b16 %v146
    %v501 = vunpack.c.l.b16 %v147
    %v502 = vunpack.c.h.b16 %v147
    %v503 = vunpack.c.l.b16 %v148
    %v504 = vunpack.c.h.b16 %v148
    %v505 = vunpack.c.l.b16 %v149
    %v506 = vunpack.c.h.b16 %v149
    %v507 = vunpack.c.l.b16 %v150
    %v508 = vunpack.c.h.b16 %v150
    %v509 = vunpack.c.l.b16 %v151
    %v510 = vunpack.c.h.b16 %v151
    %v511 = vunpack.c.l.b16 %v152
    %v512 = vunpack.c.h.b16 %v152
    %v513 = vunpack.c.l.b16 %v153
    %v514 = vunpack.c.h.b16 %v153
    %v515 = vunpack.c.l.b16 %v154
    %v516 = vunpack.c.h.b16 %v154
    %v517 = vunpack.c.l.b16 %v155
    %v518 = vunpack.c.h.b16 %v155
    %v519 = vunpack.c.l.b16 %v156
    %v520 = vunpack.c.h.b16 %v156
    %v521 = vunpack.c.l.b16 %v157
    %v522 = vunpack.c.h.b16 %v157
    %v523 = vunpack.c.l.b16 %v158
    %v524 = vunpack.c.h.b16 %v158
    %v525 = vunpack.c.l.b16 %v159
    %v526 = vunpack.c.h.b16 %v159
    %v527 = vunpack.c.l.b16 %v160
    %v528 = vunpack.c.h.b16 %v160
    %v529 = vunpack.c.l.b16 %v161
    %v530 = vunpack.c.h.b16 %v161
    %v531 = vunpack.c.l.b16 %v162
    %v532 = vunpack.c.h.b16 %v162
    %v533 = vunpack.c.l.b16 %v163
    %v534 = vunpack.c.h.b16 %v163
    %v535 = vunpack.c.l.b16 %v164
    %v536 = vunpack.c.h.b16 %v164
    %v537 = vunpack.c.l.b16 %v165
    %v538 = vunpack.c.h.b16 %v165
    %v539 = vunpack.c.l.b16 %v166
    %v540 = vunpack.c.h.b16 %v166
    %v541 = vunpack.c.l.b16 %v167
    %v542 = vunpack.c.h.b16 %v167
    %v543 = vunpack.c.l.b16 %v168
    %v544 = vunpack.c.h.b16 %v168
    %v545 = vunpack.c.l.b16 %v169
    %v546 = vunpack.c.h.b16 %v169
    %v547 = vunpack.c.l.b16 %v170
    %v548 = vunpack.c.h.b16 %v170
    %v549 = vunpack.c.l.b16 %v171
    %v550 = vunpack.c.h.b16 %v171
    %v551 = vunpack.c.l.b16 %v172
    %v552 = vunpack.c.h.b16 %v172
    %v553 = vunpack.c.l.b16 %v173
    %v554 = vunpack.c.h.b16 %v173
    %v555 = vunpack.c.l.b16 %v174
    %v556 = vunpack.c.h.b16 %v174
    %v557 = vunpack.c.l.b16 %v175
    %v558 = vunpack.c.h.b16 %v175
    %v559 = vunpack.c.l.b16 %v176
    %v560 = vunpack.c.h.b16 %v176
    %v561 = vunpack.c.l.b16 %v177
    %v562 = vunpack.c.h.b16 %v177
    %v563 = vunpack.c.l.b16 %v178
    %v564 = vunpack.c.h.b16 %v178
    %v565 = vunpack.c.l.b16 %v179
    %v566 = vunpack.c.h.b16 %v179
    %v567 = vunpack.c.l.b16 %v180
    %v568 = vunpack.c.h.b16 %v180
    %v569 = vunpack.c.l.b16 %v181
    %v570 = vunpack.c.h.b16 %v181
    %v571 = vunpack.c.l.b16 %v182
    %v572 = vunpack.c.h.b16 %v182
    %v573 = vunpack.c.l.b16 %v183
    %v574 = vunpack.c.h.b16 %v183
    %v575 = vunpack.c.l.b16 %v184
    %v576 = vunpack.c.h.b16 %v184
    %v577 = vunpack.c.l.b16 %v185
    %v578 = vunpack.c.h.b16 %v185
    %v579 = vunpack.c.l.b16 %v186
    %v580 = vunpack.c.h.b16 %v186
    %v581 = vunpack.c.l.b16 %v187
    %v582 = vunpack.c.h.b16 %v187
    %v583 = vunpack.c.l.b16 %v188
    %v584 = vunpack.c.h.b16 %v188
    %v585 = vunpack.c.l.b16 %v189
    %v586 = vunpack.c.h.b16 %v189
    %v587 = vunpack.c.l.b16 %v190
    %v588 = vunpack.c.h.b16 %v190
    %v589 = vunpack.c.l.b16 %v191
    %v590 = vunpack.c.h.b16 %v191
    %v591 = vunpack.c.l.b16 %v192
    %v592 = vunpack.c.h.b16 %v192
    %v593 = vunpack.c.l.b16 %v193
    %v594 = vunpack.c.h.b16 %v193
    %v595 = vunpack.c.l.b16 %v194
    %v596 = vunpack.c.h.b16 %v194
    %v597 = vunpack.c.l.b16 %v195
    %v598 = vunpack.c.h.b16 %v195
    %v599 = vunpack.c.l.b16 %v196
    %v600 = vunpack.c.h.b16 %v196
    %v601 = vunpack.c.l.b16 %v197
    %v602 = vunpack.c.h.b16 %v197
    %v603 = vunpack.c.l.b16 %v198
    %v604 = vunpack.c.h.b16 %v198
    %v605 = vunpack.c.l.b16 %v199
    %v606 = vunpack.c.h.b16 %v199
    %v607 = vunpack.c.l.b16 %v200
    %v608 = vunpack.c.h.b16 %v200
    %v609 = vunpack.c.l.b16 %v201
    %v610 = vunpack.c.h.b16 %v201
    %v611 = vunpack.c.l.b16 %v202
    %v612 = vunpack.c.h.b16 %v202
    %v613 = vunpack.c.l.b16 %v203
    %v614 = vunpack.c.h.b16 %v203
    %v615 = vunpack.c.l.b16 %v204
    %v616 = vunpack.c.h.b16 %v204
    %v617 = vunpack.c.l.b16 %v205
    %v618 = vunpack.c.h.b16 %v205
    %v619 = vunpack.c.l.b16 %v206
    %v620 = vunpack.c.h.b16 %v206
    %v621 = vunpack.c.l.b16 %v207
    %v622 = vunpack.c.h.b16 %v207
    %v623 = vunpack.c.l.b16 %v208
    %v624 = vunpack.c.h.b16 %v208
    %v625 = vunpack.c.l.b16 %v209
    %v626 = vunpack.c.h.b16 %v209
    %v627 = vunpack.c.l.b16 %v210
    %v628 = vunpack.c.h.b16 %v210
    %v629 = vpack.c.b16 %v375, %v373
    %v630 = vpack.c.b16 %v376, %v374
    %v631 = vpack.c.b16 %v379, %v377
    %v632 = vpack.c.b16 %v380, %v378
    %v633 = vpack.c.b16 %v383, %v381
    %v634 = vpack.c.b16 %v384, %v382
    %v635 = vpack.c.b16 %v387, %v385
    %v636 = vpack.c.b16 %v388, %v386
    %v637 = vpack.c.b16 %v391, %v389
    %v638 = vpack.c.b16 %v392, %v390
    %v639 = vpack.c.b16 %v395, %v393
    %v640 = vpack.c.b16 %v396, %v394
    %v641 = vpack.c.b16 %v399, %v397
    %v642 = vpack.c.b16 %v400, %v398
    %v643 = vpack.c.b16 %v403, %v401
    %v644 = vpack.c.b16 %v404, %v402
    %v645 = vpack.c.b16 %v407, %v405
    %v646 = vpack.c.b16 %v408, %v406
    %v647 = vpack.c.b16 %v411, %v409
    %v648 = vpack.c.b16 %v412, %v410
    %v649 = vpack.c.b16 %v415, %v413
    %v650 = vpack.c.b16 %v416, %v414
    %v651 = vpack.c.b16 %v419, %v417
    %v652 = vpack.c.b16 %v420, %v418
    %v653 = vpack.c.b16 %v423, %v421
    %v654 = vpack.c.b16 %v424, %v422
    %v655 = vpack.c.b16 %v427, %v425
    %v656 = vpack.c.b16 %v428, %v426
    %v657 = vpack.c.b16 %v431, %v429
    %v658 = vpack.c.b16 %v432, %v430
    %v659 = vpack.c.b16 %v435, %v433
    %v660 = vpack.c.b16 %v436, %v434
    %v661 = vpack.c.b16 %v439, %v437
    %v662 = vpack.c.b16 %v440, %v438
    %v663 = vpack.c.b16 %v443, %v441
    %v664 = vpack.c.b16 %v444, %v442
    %v665 = vpack.c.b16 %v447, %v445
    %v666 = vpack.c.b16 %v448, %v446
    %v667 = vpack.c.b16 %v451, %v449
    %v668 = vpack.c.b16 %v452, %v450
    %v669 = vpack.c.b16 %v455, %v453
    %v670 = vpack.c.b16 %v456, %v454
    %v671 = vpack.c.b16 %v459, %v457
    %v672 = vpack.c.b16 %v460, %v458
    %v673 = vpack.c.b16 %v463, %v461
    %v674 = vpack.c.b16 %v464, %v462
    %v675 = vpack.c.b16 %v467, %v465
    %v676 = vpack.c.b16 %v468, %v466
    %v677 = vpack.c.b16 %v471, %v469
    %v678 = vpack.c.b16 %v472, %v470
    %v679 = vpack.c.b16 %v475, %v473
    %v680 = vpack.c.b16 %v476, %v474
    %v681 = vpack.c.b16 %v479, %v477
    %v682 = vpack.c.b16 %v480, %v478
    %v683 = vpack.c.b16 %v483, %v481
    %v684 = vpack.c.b16 %v484, %v482
    %v685 = vpack.c.b16 %v487, %v485
    %v686 = vpack.c.b16 %v488, %v486
    %v687 = vpack.c.b16 %v491, %v489
    %v688 = vpack.c.b16 %v492, %v490
    %v689 = vpack.c.b16 %v495, %v493
    %v690 = vpack.c.b16 %v496, %v494
    %v691 = vpack.c.b16 %v499, %v497
    %v692 = vpack.c.b16 %v500, %v498
    %v693 = vpack.c.b16 %v503, %v501
    %v694 = vpack.c.b16 %v504, %v502
    %v695 = vpack.c.b16 %v507, %v505
    %v696 = vpack.c.b16 %v508, %v506
    %v697 = vpack.c.b16 %v511, %v509
    %v698 = vpack.c.b16 %v512, %v510
    %v699 = vpack.c.b16 %v515, %v513
    %v700 = vpack.c.b16 %v516, %v514
    %v701 = vpack.c.b16 %v519, %v517
    %v702 = vpack.c.b16 %v520, %v518
    %v703 = vpack.c.b16 %v523, %v521
    %v704 = vpack.c.b16 %v524, %v522
    %v705 = vpack.c.b16 %v527, %v525
    %v706 = vpack.c.b16 %v528, %v526
    %v707 = vpack.c.b16 %v531, %v529
    %v708 = vpack.c.b16 %v532, %v530
    %v709 = vpack.c.b16 %v535, %v533
    %v710 = vpack.c.b16 %v536, %v534
    %v711 = vpack.c.b16 %v539, %v537
    %v712 = vpack.c.b16 %v540, %v538
    %v713 = vpack.c.b16 %v543, %v541
    %v714 = vpack.c.b16 %v544, %v542
    %v715 = vpack.c.b16 %v547, %v545
    %v716 = vpack.c.b16 %v548, %v546
    %v717 = vpack.c.b16 %v551, %v549
    %v718 = vpack.c.b16 %v552, %v550
    %v719 = vpack.c.b16 %v555, %v553
    %v720 = vpack.c.b16 %v556, %v554
    %v721 = vpack.c.b16 %v559, %v557
    %v722 = vpack.c.b16 %v560, %v558
    %v723 = vpack.c.b16 %v563, %v561
    %v724 = vpack.c.b16 %v564, %v562
    %v725 = vpack.c.b16 %v567, %v565
    %v726 = vpack.c.b16 %v568, %v566
    %v727 = vpack.c.b16 %v571, %v569
    %v728 = vpack.c.b16 %v572, %v570
    %v729 = vpack.c.b16 %v575, %v573
    %v730 = vpack.c.b16 %v576, %v574
    %v731 = vpack.c.b16 %v579, %v577
    %v732 = vpack.c.b16 %v580, %v578
    %v733 = vpack.c.b16 %v583, %v581
    %v734 = vpack.c.b16 %v584, %v582
    %v735 = vpack.c.b16 %v587, %v585
    %v736 = vpack.c.b16 %v588, %v586
    %v737 = vpack.c.b16 %v591, %v589
    %v738 = vpack.c.b16 %v592, %v590
    %v739 = vpack.c.b16 %v595, %v593
    %v740 = vpack.c.b16 %v596, %v594
    %v741 = vpack.c.b16 %v599, %v597
    %v742 = vpack.c.b16 %v600, %v598
    %v743 = vpack.c.b16 %v603, %v601
    %v744 = vpack.c.b16 %v604, %v602
    %v745 = vpack.c.b16 %v607, %v605
    %v746 = vpack.c.b16 %v608, %v606
    %v747 = vpack.c.b16 %v611, %v609
    %v748 = vpack.c.b16 %v612, %v610
    %v749 = vpack.c.b16 %v615, %v613
    %v750 = vpack.c.b16 %v616, %v614
    %v751 = vpack.c.b16 %v619, %v617
    %v752 = vpack.c.b16 %v620, %v618
    %v753 = vpack.c.b16 %v623, %v621
    %v754 = vpack.c.b16 %v624, %v622
    %v755 = vpack.c.b16 %v627, %v625
    %v756 = vpack.c.b16 %v628, %v626
    %885 = vmatpush.bf16.msra.mxu0 %v643
    %886 = vmatpush.bf16.msra.mxu0 %v641
    %887 = vmatpush.bf16.msra.mxu0 %v639
    %888 = vmatpush.bf16.msra.mxu0 %v637
    %889 = vmatpush.bf16.msra.mxu0 %v635
    %890 = vmatpush.bf16.msra.mxu0 %v633
    %891 = vmatpush.bf16.msra.mxu0 %v631
    %892 = vmatpush.bf16.msra.mxu0 %v629
    %893 = vmatmul.bf16.gmra.mxu0 %v229
    %v894 = vpop.f32.mrf.mxu0
    %v895 = vadd.f32 %v213, %v894
    %v896 = vpop.f32.mrf.mxu0
    %897 = vdwg.mxu0
    %898 = vmatpush.bf16.msra.mxu0 %v659
    %899 = vmatpush.bf16.msra.mxu0 %v657
    %900 = vmatpush.bf16.msra.mxu0 %v655
    %901 = vmatpush.bf16.msra.mxu0 %v653
    %902 = vmatpush.bf16.msra.mxu0 %v651
    %903 = vmatpush.bf16.msra.mxu0 %v649
    %904 = vmatpush.bf16.msra.mxu0 %v647
    %905 = vmatpush.bf16.msra.mxu0 %v645
    %906 = vmatmul.bf16.gmra.mxu0 %v230
    %v907 = vpop.f32.mrf.mxu0
    %v908 = vadd.f32 %v895, %v907
    %v909 = vpop.f32.mrf.mxu0
    %910 = vdwg.mxu0
    %911 = vmatpush.bf16.msra.mxu0 %v675
    %912 = vmatpush.bf16.msra.mxu0 %v673
    %913 = vmatpush.bf16.msra.mxu0 %v671
    %914 = vmatpush.bf16.msra.mxu0 %v669
    %915 = vmatpush.bf16.msra.mxu0 %v667
    %916 = vmatpush.bf16.msra.mxu0 %v665
    %917 = vmatpush.bf16.msra.mxu0 %v663
    %918 = vmatpush.bf16.msra.mxu0 %v661
    %919 = vmatmul.bf16.gmra.mxu0 %v231
    %v920 = vpop.f32.mrf.mxu0
    %v921 = vadd.f32 %v908, %v920
    %v922 = vpop.f32.mrf.mxu0
    %923 = vdwg.mxu0
    %924 = vmatpush.bf16.msra.mxu0 %v691
    %925 = vmatpush.bf16.msra.mxu0 %v689
    %926 = vmatpush.bf16.msra.mxu0 %v687
    %927 = vmatpush.bf16.msra.mxu0 %v685
    %928 = vmatpush.bf16.msra.mxu0 %v683
    %929 = vmatpush.bf16.msra.mxu0 %v681
    %930 = vmatpush.bf16.msra.mxu0 %v679
    %931 = vmatpush.bf16.msra.mxu0 %v677
    %932 = vmatmul.bf16.gmra.mxu0 %v232
    %v933 = vpop.f32.mrf.mxu0
    %v934 = vadd.f32 %v921, %v933
    %v935 = vpop.f32.mrf.mxu0
    %936 = vdwg.mxu0
    %937 = vmatpush.bf16.msra.mxu0 %v707
    %938 = vmatpush.bf16.msra.mxu0 %v705
    %939 = vmatpush.bf16.msra.mxu0 %v703
    %940 = vmatpush.bf16.msra.mxu0 %v701
    %941 = vmatpush.bf16.msra.mxu0 %v699
    %942 = vmatpush.bf16.msra.mxu0 %v697
    %943 = vmatpush.bf16.msra.mxu0 %v695
    %944 = vmatpush.bf16.msra.mxu0 %v693
    %945 = vmatmul.bf16.gmra.mxu0 %v233
    %v946 = vpop.f32.mrf.mxu0
    %v947 = vadd.f32 %v934, %v946
    %v948 = vpop.f32.mrf.mxu0
    %949 = vdwg.mxu0
    %950 = vmatpush.bf16.msra.mxu0 %v723
    %951 = vmatpush.bf16.msra.mxu0 %v721
    %952 = vmatpush.bf16.msra.mxu0 %v719
    %953 = vmatpush.bf16.msra.mxu0 %v717
    %954 = vmatpush.bf16.msra.mxu0 %v715
    %955 = vmatpush.bf16.msra.mxu0 %v713
    %956 = vmatpush.bf16.msra.mxu0 %v711
    %957 = vmatpush.bf16.msra.mxu0 %v709
    %958 = vmatmul.bf16.gmra.mxu0 %v234
    %v959 = vpop.f32.mrf.mxu0
    %v960 = vadd.f32 %v947, %v959
    %v961 = vpop.f32.mrf.mxu0
    %962 = vdwg.mxu0
    %963 = vmatpush.bf16.msra.mxu0 %v739
    %964 = vmatpush.bf16.msra.mxu0 %v737
    %965 = vmatpush.bf16.msra.mxu0 %v735
    %966 = vmatpush.bf16.msra.mxu0 %v733
    %967 = vmatpush.bf16.msra.mxu0 %v731
    %968 = vmatpush.bf16.msra.mxu0 %v729
    %969 = vmatpush.bf16.msra.mxu0 %v727
    %970 = vmatpush.bf16.msra.mxu0 %v725
    %971 = vmatmul.bf16.gmra.mxu0 %v235
    %v972 = vpop.f32.mrf.mxu0
    %v973 = vadd.f32 %v960, %v972
    %v974 = vpop.f32.mrf.mxu0
    %975 = vdwg.mxu0
    %976 = vmatpush.bf16.msra.mxu0 %v755
    %977 = vmatpush.bf16.msra.mxu0 %v753
    %978 = vmatpush.bf16.msra.mxu0 %v751
    %979 = vmatpush.bf16.msra.mxu0 %v749
    %980 = vmatpush.bf16.msra.mxu0 %v747
    %981 = vmatpush.bf16.msra.mxu0 %v745
    %982 = vmatpush.bf16.msra.mxu0 %v743
    %983 = vmatpush.bf16.msra.mxu0 %v741
    %984 = vmatmul.bf16.gmra.mxu0 %v236
    %v985 = vpop.f32.mrf.mxu0
    %v986 = vadd.f32 %v973, %v985
    %v987 = vpop.f32.mrf.mxu0
    %988 = vdwg.mxu0
    %989 = vmatpush.bf16.msra.mxu0 %v644
    %990 = vmatpush.bf16.msra.mxu0 %v642
    %991 = vmatpush.bf16.msra.mxu0 %v640
    %992 = vmatpush.bf16.msra.mxu0 %v638
    %993 = vmatpush.bf16.msra.mxu0 %v636
    %994 = vmatpush.bf16.msra.mxu0 %v634
    %995 = vmatpush.bf16.msra.mxu0 %v632
    %996 = vmatpush.bf16.msra.mxu0 %v630
    %997 = vmatmul.bf16.gmra.mxu0 %v229
    %v998 = vpop.f32.mrf.mxu0
    %v999 = vadd.f32 %v214, %v998
    %v1000 = vpop.f32.mrf.mxu0
    %1001 = vdwg.mxu0
    %1002 = vmatpush.bf16.msra.mxu0 %v660
    %1003 = vmatpush.bf16.msra.mxu0 %v658
    %1004 = vmatpush.bf16.msra.mxu0 %v656
    %1005 = vmatpush.bf16.msra.mxu0 %v654
    %1006 = vmatpush.bf16.msra.mxu0 %v652
    %1007 = vmatpush.bf16.msra.mxu0 %v650
    %1008 = vmatpush.bf16.msra.mxu0 %v648
    %1009 = vmatpush.bf16.msra.mxu0 %v646
    %1010 = vmatmul.bf16.gmra.mxu0 %v230
    %v1011 = vpop.f32.mrf.mxu0
    %v1012 = vadd.f32 %v999, %v1011
    %v1013 = vpop.f32.mrf.mxu0
    %1014 = vdwg.mxu0
    %1015 = vmatpush.bf16.msra.mxu0 %v676
    %1016 = vmatpush.bf16.msra.mxu0 %v674
    %1017 = vmatpush.bf16.msra.mxu0 %v672
    %1018 = vmatpush.bf16.msra.mxu0 %v670
    %1019 = vmatpush.bf16.msra.mxu0 %v668
    %1020 = vmatpush.bf16.msra.mxu0 %v666
    %1021 = vmatpush.bf16.msra.mxu0 %v664
    %1022 = vmatpush.bf16.msra.mxu0 %v662
    %1023 = vmatmul.bf16.gmra.mxu0 %v231
    %v1024 = vpop.f32.mrf.mxu0
    %v1025 = vadd.f32 %v1012, %v1024
    %v1026 = vpop.f32.mrf.mxu0
    %1027 = vdwg.mxu0
    %1028 = vmatpush.bf16.msra.mxu0 %v692
    %1029 = vmatpush.bf16.msra.mxu0 %v690
    %1030 = vmatpush.bf16.msra.mxu0 %v688
    %1031 = vmatpush.bf16.msra.mxu0 %v686
    %1032 = vmatpush.bf16.msra.mxu0 %v684
    %1033 = vmatpush.bf16.msra.mxu0 %v682
    %1034 = vmatpush.bf16.msra.mxu0 %v680
    %1035 = vmatpush.bf16.msra.mxu0 %v678
    %1036 = vmatmul.bf16.gmra.mxu0 %v232
    %v1037 = vpop.f32.mrf.mxu0
    %v1038 = vadd.f32 %v1025, %v1037
    %v1039 = vpop.f32.mrf.mxu0
    %1040 = vdwg.mxu0
    %1041 = vmatpush.bf16.msra.mxu0 %v708
    %1042 = vmatpush.bf16.msra.mxu0 %v706
    %1043 = vmatpush.bf16.msra.mxu0 %v704
    %1044 = vmatpush.bf16.msra.mxu0 %v702
    %1045 = vmatpush.bf16.msra.mxu0 %v700
    %1046 = vmatpush.bf16.msra.mxu0 %v698
    %1047 = vmatpush.bf16.msra.mxu0 %v696
    %1048 = vmatpush.bf16.msra.mxu0 %v694
    %1049 = vmatmul.bf16.gmra.mxu0 %v233
    %v1050 = vpop.f32.mrf.mxu0
    %v1051 = vadd.f32 %v1038, %v1050
    %v1052 = vpop.f32.mrf.mxu0
    %1053 = vdwg.mxu0
    %1054 = vmatpush.bf16.msra.mxu0 %v724
    %1055 = vmatpush.bf16.msra.mxu0 %v722
    %1056 = vmatpush.bf16.msra.mxu0 %v720
    %1057 = vmatpush.bf16.msra.mxu0 %v718
    %1058 = vmatpush.bf16.msra.mxu0 %v716
    %1059 = vmatpush.bf16.msra.mxu0 %v714
    %1060 = vmatpush.bf16.msra.mxu0 %v712
    %1061 = vmatpush.bf16.msra.mxu0 %v710
    %1062 = vmatmul.bf16.gmra.mxu0 %v234
    %v1063 = vpop.f32.mrf.mxu0
    %v1064 = vadd.f32 %v1051, %v1063
    %v1065 = vpop.f32.mrf.mxu0
    %1066 = vdwg.mxu0
    %1067 = vmatpush.bf16.msra.mxu0 %v740
    %1068 = vmatpush.bf16.msra.mxu0 %v738
    %1069 = vmatpush.bf16.msra.mxu0 %v736
    %1070 = vmatpush.bf16.msra.mxu0 %v734
    %1071 = vmatpush.bf16.msra.mxu0 %v732
    %1072 = vmatpush.bf16.msra.mxu0 %v730
    %1073 = vmatpush.bf16.msra.mxu0 %v728
    %1074 = vmatpush.bf16.msra.mxu0 %v726
    %1075 = vmatmul.bf16.gmra.mxu0 %v235
    %v1076 = vpop.f32.mrf.mxu0
    %v1077 = vadd.f32 %v1064, %v1076
    %v1078 = vpop.f32.mrf.mxu0
    %1079 = vdwg.mxu0
    %1080 = vmatpush.bf16.msra.mxu0 %v756
    %1081 = vmatpush.bf16.msra.mxu0 %v754
    %1082 = vmatpush.bf16.msra.mxu0 %v752
    %1083 = vmatpush.bf16.msra.mxu0 %v750
    %1084 = vmatpush.bf16.msra.mxu0 %v748
    %1085 = vmatpush.bf16.msra.mxu0 %v746
    %1086 = vmatpush.bf16.msra.mxu0 %v744
    %1087 = vmatpush.bf16.msra.mxu0 %v742
    %1088 = vmatmul.bf16.gmra.mxu0 %v236
    %v1089 = vpop.f32.mrf.mxu0
    %v1090 = vadd.f32 %v1077, %v1089
    %v1091 = vpop.f32.mrf.mxu0
    %1092 = vdwg.mxu0
    %v1093 = vmax.f32 %v986, 0.0
    %v1094 = vmax.f32 %v1090, 0.0
    %v1095 = vpack.c.bf16 %v1093, %v1093
    %v1096 = vpack.c.bf16 %v1094, %v1094
    %v1097 = vld [vmem:[%s3] sm:$0xff]
    %v1098 = vld [vmem:[%s3 + $0x8] sm:$0xff]
    %v1099 = vld [vmem:[%s3 + $0x10] sm:$0xff]
    %v1100 = vld [vmem:[%s3 + $0x18] sm:$0xff]
    %v1101 = vld [vmem:[%s3 + $0x20] sm:$0xff]
    %v1102 = vld [vmem:[%s3 + $0x28] sm:$0xff]
    %v1103 = vld [vmem:[%s3 + $0x30] sm:$0xff]
    %v1104 = vld [vmem:[%s3 + $0x38] sm:$0xff]
    %v1105 = vld [vmem:[%s3 + $0x40] sm:$0xff]
    %v1106 = vld [vmem:[%s3 + $0x48] sm:$0xff]
    %v1107 = vld [vmem:[%s3 + $0x50] sm:$0xff]
    %v1108 = vld [vmem:[%s3 + $0x58] sm:$0xff]
    %v1109 = vld [vmem:[%s3 + $0x60] sm:$0xff]
    %v1110 = vld [vmem:[%s3 + $0x68] sm:$0xff]
    %v1111 = vld [vmem:[%s3 + $0x70] sm:$0xff]
    %v1112 = vld [vmem:[%s3 + $0x78] sm:$0xff]
    %v1113 = vld [vmem:[%s3 + $0x80] sm:$0xff]
    %v1114 = vld [vmem:[%s3 + $0x88] sm:$0xff]
    %v1115 = vld [vmem:[%s3 + $0x90] sm:$0xff]
    %v1116 = vld [vmem:[%s3 + $0x98] sm:$0xff]
    %v1117 = vld [vmem:[%s3 + $0xa0] sm:$0xff]
    %v1118 = vld [vmem:[%s3 + $0xa8] sm:$0xff]
    %v1119 = vld [vmem:[%s3 + $0xb0] sm:$0xff]
    %v1120 = vld [vmem:[%s3 + $0xb8] sm:$0xff]
    %v1121 = vld [vmem:[%s3 + $0xc0] sm:$0xff]
    %v1122 = vld [vmem:[%s3 + $0xc8] sm:$0xff]
    %v1123 = vld [vmem:[%s3 + $0xd0] sm:$0xff]
    %v1124 = vld [vmem:[%s3 + $0xd8] sm:$0xff]
    %v1125 = vld [vmem:[%s3 + $0xe0] sm:$0xff]
    %v1126 = vld [vmem:[%s3 + $0xe8] sm:$0xff]
    %v1127 = vld [vmem:[%s3 + $0xf0] sm:$0xff]
    %v1128 = vld [vmem:[%s3 + $0xf8] sm:$0xff]
    %v1129 = vld [vmem:[%s4] sm:$0x3]
    %v1131 = vperm.slane %v1129, 0
    %v1132 = vperm.slane %v1129, 1
    %v1167 = vunpack.c.l.b16 %v1097
    %v1168 = vunpack.c.h.b16 %v1097
    %v1169 = vunpack.c.l.b16 %v1098
    %v1170 = vunpack.c.h.b16 %v1098
    %v1171 = vunpack.c.l.b16 %v1099
    %v1172 = vunpack.c.h.b16 %v1099
    %v1173 = vunpack.c.l.b16 %v1100
    %v1174 = vunpack.c.h.b16 %v1100
    %v1175 = vunpack.c.l.b16 %v1101
    %v1176 = vunpack.c.h.b16 %v1101
    %v1177 = vunpack.c.l.b16 %v1102
    %v1178 = vunpack.c.h.b16 %v1102
    %v1179 = vunpack.c.l.b16 %v1103
    %v1180 = vunpack.c.h.b16 %v1103
    %v1181 = vunpack.c.l.b16 %v1104
    %v1182 = vunpack.c.h.b16 %v1104
    %v1183 = vunpack.c.l.b16 %v1105
    %v1184 = vunpack.c.h.b16 %v1105
    %v1185 = vunpack.c.l.b16 %v1106
    %v1186 = vunpack.c.h.b16 %v1106
    %v1187 = vunpack.c.l.b16 %v1107
    %v1188 = vunpack.c.h.b16 %v1107
    %v1189 = vunpack.c.l.b16 %v1108
    %v1190 = vunpack.c.h.b16 %v1108
    %v1191 = vunpack.c.l.b16 %v1109
    %v1192 = vunpack.c.h.b16 %v1109
    %v1193 = vunpack.c.l.b16 %v1110
    %v1194 = vunpack.c.h.b16 %v1110
    %v1195 = vunpack.c.l.b16 %v1111
    %v1196 = vunpack.c.h.b16 %v1111
    %v1197 = vunpack.c.l.b16 %v1112
    %v1198 = vunpack.c.h.b16 %v1112
    %v1199 = vunpack.c.l.b16 %v1113
    %v1200 = vunpack.c.h.b16 %v1113
    %v1201 = vunpack.c.l.b16 %v1114
    %v1202 = vunpack.c.h.b16 %v1114
    %v1203 = vunpack.c.l.b16 %v1115
    %v1204 = vunpack.c.h.b16 %v1115
    %v1205 = vunpack.c.l.b16 %v1116
    %v1206 = vunpack.c.h.b16 %v1116
    %v1207 = vunpack.c.l.b16 %v1117
    %v1208 = vunpack.c.h.b16 %v1117
    %v1209 = vunpack.c.l.b16 %v1118
    %v1210 = vunpack.c.h.b16 %v1118
    %v1211 = vunpack.c.l.b16 %v1119
    %v1212 = vunpack.c.h.b16 %v1119
    %v1213 = vunpack.c.l.b16 %v1120
    %v1214 = vunpack.c.h.b16 %v1120
    %v1215 = vunpack.c.l.b16 %v1121
    %v1216 = vunpack.c.h.b16 %v1121
    %v1217 = vunpack.c.l.b16 %v1122
    %v1218 = vunpack.c.h.b16 %v1122
    %v1219 = vunpack.c.l.b16 %v1123
    %v1220 = vunpack.c.h.b16 %v1123
    %v1221 = vunpack.c.l.b16 %v1124
    %v1222 = vunpack.c.h.b16 %v1124
    %v1223 = vunpack.c.l.b16 %v1125
    %v1224 = vunpack.c.h.b16 %v1125
    %v1225 = vunpack.c.l.b16 %v1126
    %v1226 = vunpack.c.h.b16 %v1126
    %v1227 = vunpack.c.l.b16 %v1127
    %v1228 = vunpack.c.h.b16 %v1127
    %v1229 = vunpack.c.l.b16 %v1128
    %v1230 = vunpack.c.h.b16 %v1128
    %v1231 = vpack.c.b16 %v1169, %v1167
    %v1232 = vpack.c.b16 %v1170, %v1168
    %v1233 = vpack.c.b16 %v1173, %v1171
    %v1234 = vpack.c.b16 %v1174, %v1172
    %v1235 = vpack.c.b16 %v1177, %v1175
    %v1236 = vpack.c.b16 %v1178, %v1176
    %v1237 = vpack.c.b16 %v1181, %v1179
    %v1238 = vpack.c.b16 %v1182, %v1180
    %v1239 = vpack.c.b16 %v1185, %v1183
    %v1240 = vpack.c.b16 %v1186, %v1184
    %v1241 = vpack.c.b16 %v1189, %v1187
    %v1242 = vpack.c.b16 %v1190, %v1188
    %v1243 = vpack.c.b16 %v1193, %v1191
    %v1244 = vpack.c.b16 %v1194, %v1192
    %v1245 = vpack.c.b16 %v1197, %v1195
    %v1246 = vpack.c.b16 %v1198, %v1196
    %v1247 = vpack.c.b16 %v1201, %v1199
    %v1248 = vpack.c.b16 %v1202, %v1200
    %v1249 = vpack.c.b16 %v1205, %v1203
    %v1250 = vpack.c.b16 %v1206, %v1204
    %v1251 = vpack.c.b16 %v1209, %v1207
    %v1252 = vpack.c.b16 %v1210, %v1208
    %v1253 = vpack.c.b16 %v1213, %v1211
    %v1254 = vpack.c.b16 %v1214, %v1212
    %v1255 = vpack.c.b16 %v1217, %v1215
    %v1256 = vpack.c.b16 %v1218, %v1216
    %v1257 = vpack.c.b16 %v1221, %v1219
    %v1258 = vpack.c.b16 %v1222, %v1220
    %v1259 = vpack.c.b16 %v1225, %v1223
    %v1260 = vpack.c.b16 %v1226, %v1224
    %v1261 = vpack.c.b16 %v1229, %v1227
    %v1262 = vpack.c.b16 %v1230, %v1228
    %1295 = vmatpush.bf16.msra.mxu0 %v1245
    %1296 = vmatpush.bf16.msra.mxu0 %v1243
    %1297 = vmatpush.bf16.msra.mxu0 %v1241
    %1298 = vmatpush.bf16.msra.mxu0 %v1239
    %1299 = vmatpush.bf16.msra.mxu0 %v1237
    %1300 = vmatpush.bf16.msra.mxu0 %v1235
    %1301 = vmatpush.bf16.msra.mxu0 %v1233
    %1302 = vmatpush.bf16.msra.mxu0 %v1231
    %1303 = vmatmul.bf16.gmra.mxu0 %v1095
    %v1304 = vpop.f32.mrf.mxu0
    %v1305 = vadd.f32 %v1131, %v1304
    %v1306 = vpop.f32.mrf.mxu0
    %1307 = vdwg.mxu0
    %1308 = vmatpush.bf16.msra.mxu0 %v1261
    %1309 = vmatpush.bf16.msra.mxu0 %v1259
    %1310 = vmatpush.bf16.msra.mxu0 %v1257
    %1311 = vmatpush.bf16.msra.mxu0 %v1255
    %1312 = vmatpush.bf16.msra.mxu0 %v1253
    %1313 = vmatpush.bf16.msra.mxu0 %v1251
    %1314 = vmatpush.bf16.msra.mxu0 %v1249
    %1315 = vmatpush.bf16.msra.mxu0 %v1247
    %1316 = vmatmul.bf16.gmra.mxu0 %v1096
    %v1317 = vpop.f32.mrf.mxu0
    %v1318 = vadd.f32 %v1305, %v1317
    %v1319 = vpop.f32.mrf.mxu0
    %1320 = vdwg.mxu0
    %1321 = vmatpush.bf16.msra.mxu0 %v1246
    %1322 = vmatpush.bf16.msra.mxu0 %v1244
    %1323 = vmatpush.bf16.msra.mxu0 %v1242
    %1324 = vmatpush.bf16.msra.mxu0 %v1240
    %1325 = vmatpush.bf16.msra.mxu0 %v1238
    %1326 = vmatpush.bf16.msra.mxu0 %v1236
    %1327 = vmatpush.bf16.msra.mxu0 %v1234
    %1328 = vmatpush.bf16.msra.mxu0 %v1232
    %1329 = vmatmul.bf16.gmra.mxu0 %v1095
    %v1330 = vpop.f32.mrf.mxu0
    %v1331 = vadd.f32 %v1132, %v1330
    %v1332 = vpop.f32.mrf.mxu0
    %1333 = vdwg.mxu0
    %1334 = vmatpush.bf16.msra.mxu0 %v1262
    %1335 = vmatpush.bf16.msra.mxu0 %v1260
    %1336 = vmatpush.bf16.msra.mxu0 %v1258
    %1337 = vmatpush.bf16.msra.mxu0 %v1256
    %1338 = vmatpush.bf16.msra.mxu0 %v1254
    %1339 = vmatpush.bf16.msra.mxu0 %v1252
    %1340 = vmatpush.bf16.msra.mxu0 %v1250
    %1341 = vmatpush.bf16.msra.mxu0 %v1248
    %1342 = vmatmul.bf16.gmra.mxu0 %v1096
    %v1343 = vpop.f32.mrf.mxu0
    %v1344 = vadd.f32 %v1331, %v1343
    %v1345 = vpop.f32.mrf.mxu0
    %1346 = vdwg.mxu0
    %v1347 = vmax.f32 %v1318, 0.0
    %v1348 = vmax.f32 %v1344, 0.0
    %v1349 = vpack.c.bf16 %v1347, %v1347
    %v1350 = vpack.c.bf16 %v1348, %v1348
    %v1351 = vld [vmem:[#allocation4] sm:$0xff]
    %v1352 = vld [vmem:[#allocation4 + $0x8] sm:$0xff]
    %v1353 = vld [vmem:[#allocation4 + $0x10] sm:$0xff]
    %v1354 = vld [vmem:[#allocation4 + $0x18] sm:$0xff]
    %v1355 = vld [vmem:[#allocation4 + $0x20] sm:$0xff]
    %v1356 = vld [vmem:[#allocation4 + $0x28] sm:$0xff]
    %v1357 = vld [vmem:[#allocation4 + $0x30] sm:$0xff]
    %v1358 = vld [vmem:[#allocation4 + $0x38] sm:$0xff]
    %v1359 = vld [vmem:[#allocation4 + $0x40] sm:$0xff]
    %v1360 = vld [vmem:[#allocation4 + $0x48] sm:$0xff]
    %v1361 = vld [vmem:[#allocation4 + $0x50] sm:$0xff]
    %v1362 = vld [vmem:[#allocation4 + $0x58] sm:$0xff]
    %v1363 = vld [vmem:[#allocation4 + $0x60] sm:$0xff]
    %v1364 = vld [vmem:[#allocation4 + $0x68] sm:$0xff]
    %v1365 = vld [vmem:[#allocation4 + $0x70] sm:$0xff]
    %v1366 = vld [vmem:[#allocation4 + $0x78] sm:$0xff]
    %v1367 = vld [vmem:[#allocation4 + $0x80] sm:$0xff]
    %v1368 = vld [vmem:[#allocation4 + $0x88] sm:$0xff]
    %v1369 = vld [vmem:[#allocation4 + $0x90] sm:$0xff]
    %v1370 = vld [vmem:[#allocation4 + $0x98] sm:$0xff]
    %v1371 = vld [vmem:[#allocation4 + $0xa0] sm:$0xff]
    %v1372 = vld [vmem:[#allocation4 + $0xa8] sm:$0xff]
    %v1373 = vld [vmem:[#allocation4 + $0xb0] sm:$0xff]
    %v1374 = vld [vmem:[#allocation4 + $0xb8] sm:$0xff]
    %v1375 = vld [vmem:[#allocation4 + $0xc0] sm:$0xff]
    %v1376 = vld [vmem:[#allocation4 + $0xc8] sm:$0xff]
    %v1377 = vld [vmem:[#allocation4 + $0xd0] sm:$0xff]
    %v1378 = vld [vmem:[#allocation4 + $0xd8] sm:$0xff]
    %v1379 = vld [vmem:[#allocation4 + $0xe0] sm:$0xff]
    %v1380 = vld [vmem:[#allocation4 + $0xe8] sm:$0xff]
    %v1381 = vld [vmem:[#allocation4 + $0xf0] sm:$0xff]
    %v1382 = vld [vmem:[#allocation4 + $0xf8] sm:$0xff]
    %v1383 = vld [vmem:[%s6] sm:$0x3]
    %v1385 = vperm.slane %v1383, 0
    %v1386 = vperm.slane %v1383, 1
    %v1421 = vunpack.c.l.b16 %v1351
    %v1422 = vunpack.c.h.b16 %v1351
    %v1423 = vunpack.c.l.b16 %v1352
    %v1424 = vunpack.c.h.b16 %v1352
    %v1425 = vunpack.c.l.b16 %v1353
    %v1426 = vunpack.c.h.b16 %v1353
    %v1427 = vunpack.c.l.b16 %v1354
    %v1428 = vunpack.c.h.b16 %v1354
    %v1429 = vunpack.c.l.b16 %v1355
    %v1430 = vunpack.c.h.b16 %v1355
    %v1431 = vunpack.c.l.b16 %v1356
    %v1432 = vunpack.c.h.b16 %v1356
    %v1433 = vunpack.c.l.b16 %v1357
    %v1434 = vunpack.c.h.b16 %v1357
    %v1435 = vunpack.c.l.b16 %v1358
    %v1436 = vunpack.c.h.b16 %v1358
    %v1437 = vunpack.c.l.b16 %v1359
    %v1438 = vunpack.c.h.b16 %v1359
    %v1439 = vunpack.c.l.b16 %v1360
    %v1440 = vunpack.c.h.b16 %v1360
    %v1441 = vunpack.c.l.b16 %v1361
    %v1442 = vunpack.c.h.b16 %v1361
    %v1443 = vunpack.c.l.b16 %v1362
    %v1444 = vunpack.c.h.b16 %v1362
    %v1445 = vunpack.c.l.b16 %v1363
    %v1446 = vunpack.c.h.b16 %v1363
    %v1447 = vunpack.c.l.b16 %v1364
    %v1448 = vunpack.c.h.b16 %v1364
    %v1449 = vunpack.c.l.b16 %v1365
    %v1450 = vunpack.c.h.b16 %v1365
    %v1451 = vunpack.c.l.b16 %v1366
    %v1452 = vunpack.c.h.b16 %v1366
    %v1453 = vunpack.c.l.b16 %v1367
    %v1454 = vunpack.c.h.b16 %v1367
    %v1455 = vunpack.c.l.b16 %v1368
    %v1456 = vunpack.c.h.b16 %v1368
    %v1457 = vunpack.c.l.b16 %v1369
    %v1458 = vunpack.c.h.b16 %v1369
    %v1459 = vunpack.c.l.b16 %v1370
    %v1460 = vunpack.c.h.b16 %v1370
    %v1461 = vunpack.c.l.b16 %v1371
    %v1462 = vunpack.c.h.b16 %v1371
    %v1463 = vunpack.c.l.b16 %v1372
    %v1464 = vunpack.c.h.b16 %v1372
    %v1465 = vunpack.c.l.b16 %v1373
    %v1466 = vunpack.c.h.b16 %v1373
    %v1467 = vunpack.c.l.b16 %v1374
    %v1468 = vunpack.c.h.b16 %v1374
    %v1469 = vunpack.c.l.b16 %v1375
    %v1470 = vunpack.c.h.b16 %v1375
    %v1471 = vunpack.c.l.b16 %v1376
    %v1472 = vunpack.c.h.b16 %v1376
    %v1473 = vunpack.c.l.b16 %v1377
    %v1474 = vunpack.c.h.b16 %v1377
    %v1475 = vunpack.c.l.b16 %v1378
    %v1476 = vunpack.c.h.b16 %v1378
    %v1477 = vunpack.c.l.b16 %v1379
    %v1478 = vunpack.c.h.b16 %v1379
    %v1479 = vunpack.c.l.b16 %v1380
    %v1480 = vunpack.c.h.b16 %v1380
    %v1481 = vunpack.c.l.b16 %v1381
    %v1482 = vunpack.c.h.b16 %v1381
    %v1483 = vunpack.c.l.b16 %v1382
    %v1484 = vunpack.c.h.b16 %v1382
    %v1485 = vpack.c.b16 %v1423, %v1421
    %v1486 = vpack.c.b16 %v1424, %v1422
    %v1487 = vpack.c.b16 %v1427, %v1425
    %v1488 = vpack.c.b16 %v1428, %v1426
    %v1489 = vpack.c.b16 %v1431, %v1429
    %v1490 = vpack.c.b16 %v1432, %v1430
    %v1491 = vpack.c.b16 %v1435, %v1433
    %v1492 = vpack.c.b16 %v1436, %v1434
    %v1493 = vpack.c.b16 %v1439, %v1437
    %v1494 = vpack.c.b16 %v1440, %v1438
    %v1495 = vpack.c.b16 %v1443, %v1441
    %v1496 = vpack.c.b16 %v1444, %v1442
    %v1497 = vpack.c.b16 %v1447, %v1445
    %v1498 = vpack.c.b16 %v1448, %v1446
    %v1499 = vpack.c.b16 %v1451, %v1449
    %v1500 = vpack.c.b16 %v1452, %v1450
    %v1501 = vpack.c.b16 %v1455, %v1453
    %v1502 = vpack.c.b16 %v1456, %v1454
    %v1503 = vpack.c.b16 %v1459, %v1457
    %v1504 = vpack.c.b16 %v1460, %v1458
    %v1505 = vpack.c.b16 %v1463, %v1461
    %v1506 = vpack.c.b16 %v1464, %v1462
    %v1507 = vpack.c.b16 %v1467, %v1465
    %v1508 = vpack.c.b16 %v1468, %v1466
    %v1509 = vpack.c.b16 %v1471, %v1469
    %v1510 = vpack.c.b16 %v1472, %v1470
    %v1511 = vpack.c.b16 %v1475, %v1473
    %v1512 = vpack.c.b16 %v1476, %v1474
    %v1513 = vpack.c.b16 %v1479, %v1477
    %v1514 = vpack.c.b16 %v1480, %v1478
    %v1515 = vpack.c.b16 %v1483, %v1481
    %v1516 = vpack.c.b16 %v1484, %v1482
    %1549 = vmatpush.bf16.msra.mxu0 %v1499
    %1550 = vmatpush.bf16.msra.mxu0 %v1497
    %1551 = vmatpush.bf16.msra.mxu0 %v1495
    %1552 = vmatpush.bf16.msra.mxu0 %v1493
    %1553 = vmatpush.bf16.msra.mxu0 %v1491
    %1554 = vmatpush.bf16.msra.mxu0 %v1489
    %1555 = vmatpush.bf16.msra.mxu0 %v1487
    %1556 = vmatpush.bf16.msra.mxu0 %v1485
    %1557 = vmatmul.bf16.gmra.mxu0 %v1349
    %v1558 = vpop.f32.mrf.mxu0
    %v1559 = vadd.f32 %v1385, %v1558
    %v1560 = vpop.f32.mrf.mxu0
    %1561 = vdwg.mxu0
    %1562 = vmatpush.bf16.msra.mxu0 %v1515
    %1563 = vmatpush.bf16.msra.mxu0 %v1513
    %1564 = vmatpush.bf16.msra.mxu0 %v1511
    %1565 = vmatpush.bf16.msra.mxu0 %v1509
    %1566 = vmatpush.bf16.msra.mxu0 %v1507
    %1567 = vmatpush.bf16.msra.mxu0 %v1505
    %1568 = vmatpush.bf16.msra.mxu0 %v1503
    %1569 = vmatpush.bf16.msra.mxu0 %v1501
    %1570 = vmatmul.bf16.gmra.mxu0 %v1350
    %v1571 = vpop.f32.mrf.mxu0
    %v1572 = vadd.f32 %v1559, %v1571
    %v1573 = vpop.f32.mrf.mxu0
    %1574 = vdwg.mxu0
    %1575 = vmatpush.bf16.msra.mxu0 %v1500
    %1576 = vmatpush.bf16.msra.mxu0 %v1498
    %1577 = vmatpush.bf16.msra.mxu0 %v1496
    %1578 = vmatpush.bf16.msra.mxu0 %v1494
    %1579 = vmatpush.bf16.msra.mxu0 %v1492
    %1580 = vmatpush.bf16.msra.mxu0 %v1490
    %1581 = vmatpush.bf16.msra.mxu0 %v1488
    %1582 = vmatpush.bf16.msra.mxu0 %v1486
    %1583 = vmatmul.bf16.gmra.mxu0 %v1349
    %v1584 = vpop.f32.mrf.mxu0
    %v1585 = vadd.f32 %v1386, %v1584
    %v1586 = vpop.f32.mrf.mxu0
    %1587 = vdwg.mxu0
    %1588 = vmatpush.bf16.msra.mxu0 %v1516
    %1589 = vmatpush.bf16.msra.mxu0 %v1514
    %1590 = vmatpush.bf16.msra.mxu0 %v1512
    %1591 = vmatpush.bf16.msra.mxu0 %v1510
    %1592 = vmatpush.bf16.msra.mxu0 %v1508
    %1593 = vmatpush.bf16.msra.mxu0 %v1506
    %1594 = vmatpush.bf16.msra.mxu0 %v1504
    %1595 = vmatpush.bf16.msra.mxu0 %v1502
    %1596 = vmatmul.bf16.gmra.mxu0 %v1350
    %v1597 = vpop.f32.mrf.mxu0
    %v1598 = vadd.f32 %v1585, %v1597
    %v1599 = vpop.f32.mrf.mxu0
    %1600 = vdwg.mxu0
    %v1601 = vmax.f32 %v1572, 0.0
    %v1602 = vmax.f32 %v1598, 0.0
    %v1603 = vpack.c.bf16 %v1601, %v1601
    %v1604 = vpack.c.bf16 %v1602, %v1602
    %v1605 = vld [vmem:[#allocation6] sm:$0xf]
    %v1606 = vld [vmem:[#allocation6 + $0x4] sm:$0xf]
    %v1607 = vld [vmem:[#allocation6 + $0x8] sm:$0xf]
    %v1608 = vld [vmem:[#allocation6 + $0xc] sm:$0xf]
    %v1609 = vld [vmem:[#allocation6 + $0x10] sm:$0xf]
    %v1610 = vld [vmem:[#allocation6 + $0x14] sm:$0xf]
    %v1611 = vld [vmem:[#allocation6 + $0x18] sm:$0xf]
    %v1612 = vld [vmem:[#allocation6 + $0x1c] sm:$0xf]
    %v1613 = vld [vmem:[#allocation6 + $0x20] sm:$0xf]
    %v1614 = vld [vmem:[#allocation6 + $0x24] sm:$0xf]
    %v1615 = vld [vmem:[#allocation6 + $0x28] sm:$0xf]
    %v1616 = vld [vmem:[#allocation6 + $0x2c] sm:$0xf]
    %v1617 = vld [vmem:[#allocation6 + $0x30] sm:$0xf]
    %v1618 = vld [vmem:[#allocation6 + $0x34] sm:$0xf]
    %v1619 = vld [vmem:[#allocation6 + $0x38] sm:$0xf]
    %v1620 = vld [vmem:[#allocation6 + $0x3c] sm:$0xf]
    %v1621 = vld [vmem:[#allocation6 + $0x40] sm:$0xf]
    %v1622 = vld [vmem:[#allocation6 + $0x44] sm:$0xf]
    %v1623 = vld [vmem:[#allocation6 + $0x48] sm:$0xf]
    %v1624 = vld [vmem:[#allocation6 + $0x4c] sm:$0xf]
    %v1625 = vld [vmem:[#allocation6 + $0x50] sm:$0xf]
    %v1626 = vld [vmem:[#allocation6 + $0x54] sm:$0xf]
    %v1627 = vld [vmem:[#allocation6 + $0x58] sm:$0xf]
    %v1628 = vld [vmem:[#allocation6 + $0x5c] sm:$0xf]
    %v1629 = vld [vmem:[#allocation6 + $0x60] sm:$0xf]
    %v1630 = vld [vmem:[#allocation6 + $0x64] sm:$0xf]
    %v1631 = vld [vmem:[#allocation6 + $0x68] sm:$0xf]
    %v1632 = vld [vmem:[#allocation6 + $0x6c] sm:$0xf]
    %v1633 = vld [vmem:[#allocation6 + $0x70] sm:$0xf]
    %v1634 = vld [vmem:[#allocation6 + $0x74] sm:$0xf]
    %v1635 = vld [vmem:[#allocation6 + $0x78] sm:$0xf]
    %v1636 = vld [vmem:[#allocation6 + $0x7c] sm:$0xf]
    %v1637 = vld [vmem:[%s8] sm:$0x1]
    %v1639 = vperm.slane %v1637, 0
    %v1673 = vunpack.c.l.b16 %v1605
    %v1674 = vunpack.c.l.b16 %v1606
    %v1675 = vunpack.c.l.b16 %v1607
    %v1676 = vunpack.c.l.b16 %v1608
    %v1677 = vunpack.c.l.b16 %v1609
    %v1678 = vunpack.c.l.b16 %v1610
    %v1679 = vunpack.c.l.b16 %v1611
    %v1680 = vunpack.c.l.b16 %v1612
    %v1681 = vunpack.c.l.b16 %v1613
    %v1682 = vunpack.c.l.b16 %v1614
    %v1683 = vunpack.c.l.b16 %v1615
    %v1684 = vunpack.c.l.b16 %v1616
    %v1685 = vunpack.c.l.b16 %v1617
    %v1686 = vunpack.c.l.b16 %v1618
    %v1687 = vunpack.c.l.b16 %v1619
    %v1688 = vunpack.c.l.b16 %v1620
    %v1689 = vunpack.c.l.b16 %v1621
    %v1690 = vunpack.c.l.b16 %v1622
    %v1691 = vunpack.c.l.b16 %v1623
    %v1692 = vunpack.c.l.b16 %v1624
    %v1693 = vunpack.c.l.b16 %v1625
    %v1694 = vunpack.c.l.b16 %v1626
    %v1695 = vunpack.c.l.b16 %v1627
    %v1696 = vunpack.c.l.b16 %v1628
    %v1697 = vunpack.c.l.b16 %v1629
    %v1698 = vunpack.c.l.b16 %v1630
    %v1699 = vunpack.c.l.b16 %v1631
    %v1700 = vunpack.c.l.b16 %v1632
    %v1701 = vunpack.c.l.b16 %v1633
    %v1702 = vunpack.c.l.b16 %v1634
    %v1703 = vunpack.c.l.b16 %v1635
    %v1704 = vunpack.c.l.b16 %v1636
    %v1705 = vpack.c.b16 %v1674, %v1673
    %v1706 = vpack.c.b16 %v1676, %v1675
    %v1707 = vpack.c.b16 %v1678, %v1677
    %v1708 = vpack.c.b16 %v1680, %v1679
    %v1709 = vpack.c.b16 %v1682, %v1681
    %v1710 = vpack.c.b16 %v1684, %v1683
    %v1711 = vpack.c.b16 %v1686, %v1685
    %v1712 = vpack.c.b16 %v1688, %v1687
    %v1713 = vpack.c.b16 %v1690, %v1689
    %v1714 = vpack.c.b16 %v1692, %v1691
    %v1715 = vpack.c.b16 %v1694, %v1693
    %v1716 = vpack.c.b16 %v1696, %v1695
    %v1717 = vpack.c.b16 %v1698, %v1697
    %v1718 = vpack.c.b16 %v1700, %v1699
    %v1719 = vpack.c.b16 %v1702, %v1701
    %v1720 = vpack.c.b16 %v1704, %v1703
    %1737 = vmatpush.bf16.msra.mxu0 %v1712
    %1738 = vmatpush.bf16.msra.mxu0 %v1711
    %1739 = vmatpush.bf16.msra.mxu0 %v1710
    %1740 = vmatpush.bf16.msra.mxu0 %v1709
    %1741 = vmatpush.bf16.msra.mxu0 %v1708
    %1742 = vmatpush.bf16.msra.mxu0 %v1707
    %1743 = vmatpush.bf16.msra.mxu0 %v1706
    %1744 = vmatpush.bf16.msra.mxu0 %v1705
    %1745 = vmatmul.bf16.gmra.mxu0 %v1603
    %v1746 = vpop.f32.mrf.mxu0
    %v1747 = vadd.f32 %v1639, %v1746
    %v1748 = vpop.f32.mrf.mxu0
    %1749 = vdwg.mxu0
    %1750 = vmatpush.bf16.msra.mxu0 %v1720
    %1751 = vmatpush.bf16.msra.mxu0 %v1719
    %1752 = vmatpush.bf16.msra.mxu0 %v1718
    %1753 = vmatpush.bf16.msra.mxu0 %v1717
    %1754 = vmatpush.bf16.msra.mxu0 %v1716
    %1755 = vmatpush.bf16.msra.mxu0 %v1715
    %1756 = vmatpush.bf16.msra.mxu0 %v1714
    %1757 = vmatpush.bf16.msra.mxu0 %v1713
    %1758 = vmatmul.bf16.gmra.mxu0 %v1604
    %v1759 = vpop.f32.mrf.mxu0
    %v1760 = vadd.f32 %v1747, %v1759
    %v1761 = vpop.f32.mrf.mxu0
    %1762 = vdwg.mxu0
    %1763 = vst [vmem:[%s9] sm:$0xff] %v1760
    // Predicated region
    $region50: #{mlp_forward.1} parent=1 // pred_check
      _
    $region51: #{mlp_forward.1} parent=1 // pred_check_branch
      %1765 = sbr.rel (0) target = $region53
    $region52: #{mlp_forward.1} parent=1 // pred_region
      _
    $region53: #{mlp_forward.1} parent=1 // pred_fallthru
      _
    // Predicated region
    $region54: #{mlp_forward.1} parent=1 // pred_check
      _
    $region55: #{mlp_forward.1} parent=1 // pred_check_branch
      %1767 = sbr.rel (0) target = $region57
    $region56: #{mlp_forward.1} parent=1 // pred_region
      _
    $region57: #{mlp_forward.1} parent=1 // pred_fallthru
      _
    %1768 = vsyncpa [#allocation3], 1
    %1769 = vsyncpa [#allocation5], 1

</llo_original>
